<compile_context>
chip_gen: v6e
topology: v6e:2x2x1
jax: 0.10.0
libtpu: 0.0.40
codegen_flags: <defaults>
</compile_context>

<pallas_src>
import functools

import numpy as np
import jax
import jax.numpy as jnp
from jax import lax
from jax.experimental import pallas as pl
from jax.experimental.pallas import tpu as pltpu

try:  # production path; fallback implemented below
    from scipy.optimize import linear_sum_assignment as _scipy_lsa
except Exception:  # pragma: no cover
    _scipy_lsa = None

NUM_BODY_POINTS = 17
SIGMAS = (np.array(
    [0.26, 0.25, 0.25, 0.35, 0.35, 0.79, 0.79, 0.72, 0.72, 0.62, 0.62,
     1.07, 1.07, 0.87, 0.87, 0.89, 0.89], dtype=np.float32) / 10.0)
VARIANCES = (2.0 * SIGMAS) ** 2                      # (17,) trace-time constants

DEFAULT_ROW_TILE = 512     # rows per grid step (cap); fits VMEM on v5e/v6e/v7x
MIN_ROW_TILES = 4          # aim for >=4 grid steps so v7x megacore can split rows


def _round_up(x, m):
    return ((x + m - 1) // m) * m


def _use_bf16_oks_exp():
    """bf16 EUP exp only on v6e / v7x; keep f32 on v5e and older (no bf16 EUP/VPU)."""
    try:
        kind = jax.devices()[0].device_kind.lower()
    except Exception:
        return False
    return ('v6' in kind) or ('v7' in kind)


# --------------------------------------------------------------------------------------
# Kernel
# --------------------------------------------------------------------------------------
def _matcher_cost_kernel(n_real, m_real, focal_alpha,
                         w_class, w_bbox, w_giou, w_kpt, w_oks, use_bf16_exp,
                         # scalar-prefetch refs
                         flag_ref,
                         # inputs
                         logits_ref, onehot_ref, pbox_ref, tbox_ref,
                         kpx_ref, kpy_ref, kgx_ref, kgy_ref, vgt_ref,
                         inv_av_ref, inv_vsum_ref,
                         # outputs
                         c_ref, sums_ref):
    tn, m_pad = c_ref.shape
    i = pl.program_id(0)

    # validity mask for the per-tile partial sums (padded rows/cols excluded)
    row_idx = i * tn + lax.broadcasted_iota(jnp.int32, (tn, 1), 0)
    col_idx = lax.broadcasted_iota(jnp.int32, (1, m_pad), 1)
    mask = (row_idx < n_real) & (col_idx < m_real)

    def _msum(x):
        return jnp.sum(jnp.where(mask, x, 0.0), axis=0, keepdims=True)   # (1, M_pad)

    # ---------------- focal classification cost: gather FIRST, focal math second ------
    # logit_at[n, m] = logits[n, tgt_ids[m]]  (exact: one-hot gather via small MXU matmul)
    logit_at = jnp.dot(logits_ref[...], onehot_ref[...],
                       preferred_element_type=jnp.float32)                # (tN, M_pad)
    prob = jax.nn.sigmoid(logit_at)
    one_m = 1.0 - prob
    neg = (1.0 - focal_alpha) * (prob * prob) * (-jnp.log(one_m + 1e-8))
    pos = focal_alpha * (one_m * one_m) * (-jnp.log(prob + 1e-8))
    c_class = pos - neg                                                   # (tN, M_pad)

    # running weighted accumulator lives in the output block
    c_ref[...] = w_class * c_class

    zrow = jnp.zeros((1, m_pad), jnp.float32)
    sums_ref[...] = jnp.concatenate([_msum(c_class), zrow, zrow, zrow], axis=0)

    # ---------------- box branch (Z_pred.sum() == 0): L1 + GIoU -----------------------
    @pl.when(flag_ref[0] == 0)
    def _box_branch():
        pb = pbox_ref[...]                                                # (tN, 4)
        tb = tbox_ref[...]                                                # (4, M_pad)
        pcx, pcy, pw, ph = pb[:, 0:1], pb[:, 1:2], pb[:, 2:3], pb[:, 3:4]
        tcx, tcy, tw, th = tb[0:1, :], tb[1:2, :], tb[2:3, :], tb[3:4, :]

        c_bbox = (jnp.abs(pcx - tcx) + jnp.abs(pcy - tcy) +
                  jnp.abs(pw - tw) + jnp.abs(ph - th))                    # (tN, M_pad)

        px1, py1 = pcx - 0.5 * pw, pcy - 0.5 * ph
        px2, py2 = pcx + 0.5 * pw, pcy + 0.5 * ph
        tx1, ty1 = tcx - 0.5 * tw, tcy - 0.5 * th
        tx2, ty2 = tcx + 0.5 * tw, tcy + 0.5 * th
        parea = (px2 - px1) * (py2 - py1)                                 # (tN, 1)
        tarea = (tx2 - tx1) * (ty2 - ty1)                                 # (1, M_pad)
        inter = (jnp.maximum(jnp.minimum(px2, tx2) - jnp.maximum(px1, tx1), 0.0) *
                 jnp.maximum(jnp.minimum(py2, ty2) - jnp.maximum(py1, ty1), 0.0))
        union = parea + tarea - inter
        iou = inter * pl.reciprocal(union, approx=True)
        ew = jnp.maximum(jnp.maximum(px2, tx2) - jnp.minimum(px1, tx1), 0.0)
        eh = jnp.maximum(jnp.maximum(py2, ty2) - jnp.minimum(py1, ty1), 0.0)
        earea = ew * eh
        c_giou = -(iou - (earea - union) * pl.reciprocal(earea, approx=True))

        c_ref[...] = c_ref[...] + (w_bbox * c_bbox + w_giou * c_giou)
        sums_ref[1:2, :] = _msum(c_bbox)
        sums_ref[2:3, :] = _msum(c_giou)

    # ---------------- keypoint branch (Z_pred.sum() > 0): kpt L1 + OKS ----------------
    @pl.when(flag_ref[0] > 0)
    def _kpt_branch():
        kpx = kpx_ref[...]                                                # (tN, 17)
        kpy = kpy_ref[...]                                                # (tN, 17)
        kgx = kgx_ref[...]                                                # (17, M_pad)
        kgy = kgy_ref[...]
        vgt = vgt_ref[...]
        inv_av = inv_av_ref[...]                                          # 1/(area*var*2)

        c_kpt = jnp.zeros((tn, m_pad), jnp.float32)
        oks_num = jnp.zeros((tn, m_pad), jnp.float32)
        for k in range(NUM_BODY_POINTS):               # static unroll, static slices
            dx = kpx[:, k:k + 1] - kgx[k:k + 1, :]                        # (tN, M_pad)
            dy = kpy[:, k:k + 1] - kgy[k:k + 1, :]
            vk = vgt[k:k + 1, :]
            sq0 = (dx * dx + dy * dy) * inv_av[k:k + 1, :]
            if use_bf16_exp:
                e = jnp.exp(-(sq0.astype(jnp.bfloat16))).astype(jnp.float32)
            else:
                e = jnp.exp(-sq0)
            oks_num = oks_num + e * vk
            c_kpt = c_kpt + (jnp.abs(dx) + jnp.abs(dy)) * vk

        oks = jnp.maximum(oks_num * inv_vsum_ref[...], 1e-6)
        c_oks = 1.0 - oks

        c_ref[...] = c_ref[...] + (w_kpt * c_kpt + w_oks * c_oks)
        sums_ref[3:4, :] = _msum(c_kpt)


# --------------------------------------------------------------------------------------
# Wrapper
# --------------------------------------------------------------------------------------
def hungarian_matcher_combined_cost(pred_logits, pred_boxes, pred_keypoints,
                                    tgt_ids, tgt_boxes, tgt_keypoints, tgt_area,
                                    *, cost_class=1.0, cost_bbox=1.0, cost_giou=1.0,
                                    cost_keypoints=1.0, cost_oks=0.01,
                                    focal_alpha=0.25, row_tile=DEFAULT_ROW_TILE,
                                    min_row_tiles=MIN_ROW_TILES):
    """Returns (C, sums): combined (N, M) cost matrix and per-cost sums (4,) =
    [class, bbox, giou, keypoints] (post Z_pred branch), summed over the real region."""
    bs, nq, nc = pred_logits.shape
    N = bs * nq
    M = int(tgt_ids.shape[0])
    K = NUM_BODY_POINTS

    if M == 0:
        return jnp.zeros((N, 0), jnp.float32), jnp.zeros((4,), jnp.float32)

    # ---------------- padded sizes ------------------------------------------------------
    tN = min(int(row_tile), max(8, _round_up(-(-N // max(1, int(min_row_tiles))), 8)))
    N_pad = _round_up(N, tN)
    num_tiles = N_pad // tN
    M_pad = _round_up(M, 128)
    C_pad = _round_up(nc, 8)          # contraction-only pad (gather-then-focal)

    # ---------------- prediction-side tensors (rows padded to N_pad) --------------------
    logits = pred_logits.reshape(N, nc).astype(jnp.float32)
    boxes = pred_boxes.reshape(N, 4).astype(jnp.float32)
    kpt = pred_keypoints.reshape(N, 3 * K).astype(jnp.float32)
    Z_pred = kpt[:, :2 * K]
    kp_xy = Z_pred.reshape(N, K, 2)
    kpx, kpy = kp_xy[..., 0], kp_xy[..., 1]                                # (N, 17)

    flag = (jnp.sum(Z_pred) > 0).astype(jnp.int32).reshape((1,))           # SMEM scalar

    logits_p = jnp.pad(logits, ((0, N_pad - N), (0, C_pad - nc)))
    if N_pad > N:
        pad_box = jnp.broadcast_to(jnp.array([0.5, 0.5, 1.0, 1.0], jnp.float32),
                                   (N_pad - N, 4))
        boxes_p = jnp.concatenate([boxes, pad_box], axis=0)
    else:
        boxes_p = boxes
    kpx_p = jnp.pad(kpx, ((0, N_pad - N), (0, 0)))
    kpy_p = jnp.pad(kpy, ((0, N_pad - N), (0, 0)))

    # ---------------- target-side tensors (transposed, columns padded to M_pad) ---------
    ids = tgt_ids.astype(jnp.int32)
    ids_p = jnp.pad(ids, (0, M_pad - M), constant_values=-1)               # (M_pad,)
    onehot = (jnp.arange(C_pad, dtype=jnp.int32)[:, None] ==
              ids_p[None, :]).astype(jnp.float32)                          # (C_pad, M_pad)

    tbox_t = tgt_boxes.astype(jnp.float32).T                               # (4, M)
    if M_pad > M:
        pad_tb = jnp.broadcast_to(jnp.array([[0.5], [0.5], [1.0], [1.0]], jnp.float32),
                                  (4, M_pad - M))
        tbox_tp = jnp.concatenate([tbox_t, pad_tb], axis=1)
    else:
        tbox_tp = tbox_t

    tgt_kpts = tgt_keypoints.astype(jnp.float32)
    Z_gt = tgt_kpts[:, :2 * K].reshape(M, K, 2)
    V_gt = tgt_kpts[:, 2 * K:]                                             # (M, 17)
    kgx_tp = jnp.pad(Z_gt[..., 0].T, ((0, 0), (0, M_pad - M)))             # (17, M_pad)
    kgy_tp = jnp.pad(Z_gt[..., 1].T, ((0, 0), (0, M_pad - M)))
    vgt_tp = jnp.pad(V_gt.T, ((0, 0), (0, M_pad - M)))                     # (17, M_pad)

    area_p = jnp.pad(tgt_area.reshape(1, M).astype(jnp.float32),
                     ((0, 0), (0, M_pad - M)), constant_values=1.0)        # (1, M_pad)
    variances = jnp.asarray(VARIANCES, jnp.float32).reshape(K, 1)
    inv_area_var = 1.0 / (area_p * variances * 2.0)                        # (17, M_pad)
    inv_vsum = 1.0 / (jnp.sum(vgt_tp, axis=0, keepdims=True) + 1e-6)       # (1, M_pad)

    # ---------------- pallas call --------------------------------------------------------
    kernel = functools.partial(
        _matcher_cost_kernel, N, M, float(focal_alpha),
        float(cost_class), float(cost_bbox), float(cost_giou),
        float(cost_keypoints), float(cost_oks), _use_bf16_oks_exp())

    grid_spec = pltpu.PrefetchScalarGridSpec(
        num_scalar_prefetch=1,
        grid=(num_tiles,),
        in_specs=[
            pl.BlockSpec((tN, C_pad), lambda i, f: (i, 0)),     # logits
            pl.BlockSpec((C_pad, M_pad), lambda i, f: (0, 0)),  # one-hot of tgt ids
            pl.BlockSpec((tN, 4), lambda i, f: (i, 0)),         # pred boxes
            pl.BlockSpec((4, M_pad), lambda i, f: (0, 0)),      # tgt boxes (T)
            pl.BlockSpec((tN, K), lambda i, f: (i, 0)),         # pred kpt x
            pl.BlockSpec((tN, K), lambda i, f: (i, 0)),         # pred kpt y
            pl.BlockSpec((K, M_pad), lambda i, f: (0, 0)),      # tgt kpt x (T)
            pl.BlockSpec((K, M_pad), lambda i, f: (0, 0)),      # tgt kpt y (T)
            pl.BlockSpec((K, M_pad), lambda i, f: (0, 0)),      # tgt kpt vis (T)
            pl.BlockSpec((K, M_pad), lambda i, f: (0, 0)),      # 1/(area*var*2)
            pl.BlockSpec((1, M_pad), lambda i, f: (0, 0)),      # 1/(vis_sum+eps)
        ],
        out_specs=[
            pl.BlockSpec((tN, M_pad), lambda i, f: (i, 0)),          # combined cost
            pl.BlockSpec((None, 4, M_pad), lambda i, f: (i, 0, 0)),  # per-tile sums
        ],
    )

    # TODO(synk): for production, emit C as bfloat16 to halve HBM writeback + the D2H
    # transfer of the full (N, M) matrix; kept f32 here for numerical parity.
    C_full, part_sums = pl.pallas_call(
        kernel,
        grid_spec=grid_spec,
        out_shape=(
            jax.ShapeDtypeStruct((N_pad, M_pad), jnp.float32),
            jax.ShapeDtypeStruct((num_tiles, 4, M_pad), jnp.float32),
        ),
        compiler_params=pltpu.CompilerParams(
            dimension_semantics=("parallel",),
            vmem_limit_bytes=48 * 1024 * 1024),      # <= 64 MiB physical on v7x
    )(flag, logits_p, onehot, boxes_p, tbox_tp, kpx_p, kpy_p,
      kgx_tp, kgy_tp, vgt_tp, inv_area_var, inv_vsum)

    C = C_full[:N, :M]
    sums = part_sums.sum(axis=(0, 2))                                      # (4,)
    return C, sums


# --------------------------------------------------------------------------------------
# Host-side assignment (scipy if available, else O(n^3) shortest-augmenting-path)
# --------------------------------------------------------------------------------------
def _hungarian_rows_le_cols(cost):
    """Min-cost assignment for cost (n, m) with n <= m. Returns col index per row."""
    n, m = cost.shape
    u = np.zeros(n + 1)
    v = np.zeros(m + 1)
    p = np.zeros(m + 1, dtype=np.int64)          # p[j]: 1-indexed row matched to col j
    way = np.zeros(m + 1, dtype=np.int64)
    for i in range(1, n + 1):
        p[0] = i
        j0 = 0
        minv = np.full(m + 1, np.inf)
        used = np.zeros(m + 1, dtype=bool)
        while True:
            used[j0] = True
            i0 = p[j0]
            cur = cost[i0 - 1, :] - u[i0] - v[1:]
            unused = ~used[1:]
            upd = unused & (cur < minv[1:])
            mv = minv[1:]; mv[upd] = cur[upd]
            wv = way[1:]; wv[upd] = j0
            cand = np.where(unused, minv[1:], np.inf)
            j1 = int(np.argmin(cand)) + 1
            delta = cand[j1 - 1]
            u[p[used]] += delta
            v[used] -= delta
            minv[~used] -= delta
            j0 = j1
            if p[j0] == 0:
                break
        while j0 != 0:
            j1 = way[j0]
            p[j0] = p[j1]
            j0 = j1
    row_to_col = np.zeros(n, dtype=np.int64)
    for j in range(1, m + 1):
        if p[j] != 0:
            row_to_col[p[j] - 1] = j - 1
    return row_to_col


def _linear_sum_assignment(cost):
    cost = np.asarray(cost, dtype=np.float64)
    n_rows, n_cols = cost.shape
    if n_rows == 0 or n_cols == 0:
        return np.zeros((0,), np.int64), np.zeros((0,), np.int64)
    if _scipy_lsa is not None:
        r, c = _scipy_lsa(cost)
        return np.asarray(r, np.int64), np.asarray(c, np.int64)
    if n_rows <= n_cols:
        cols = _hungarian_rows_le_cols(cost)
        rows = np.arange(n_rows, dtype=np.int64)
    else:
        rows = _hungarian_rows_le_cols(cost.T)
        cols = np.arange(n_cols, dtype=np.int64)
    order = np.argsort(rows)
    return rows[order], cols[order]


def hungarian_matcher_forward(outputs, targets, *, cost_class=1.0, cost_bbox=1.0,
                              cost_giou=1.0, cost_keypoints=1.0, cost_oks=0.01,
                              focal_alpha=0.25):
    bs, nq = outputs['pred_logits'].shape[:2]
    N = bs * nq
    tgt_ids = jnp.concatenate([v['labels'] for v in targets])
    tgt_boxes = jnp.concatenate([v['boxes'] for v in targets])
    tgt_kpts = jnp.concatenate([v['keypoints'] for v in targets])
    tgt_area = jnp.concatenate([v['area'] for v in targets])
    M = int(tgt_ids.shape[0])
    sizes = [int(v['boxes'].shape[0]) for v in targets]

    if M == 0:
        indices = [(np.zeros((0,), np.int64), np.zeros((0,), np.int64)) for _ in targets]
        return indices, {'class': 0.0, 'bbox': 0.0, 'giou': 0.0, 'keypoints': 0.0}

    C, sums = hungarian_matcher_combined_cost(
        outputs['pred_logits'], outputs['pred_boxes'], outputs['pred_keypoints'],
        tgt_ids, tgt_boxes, tgt_kpts, tgt_area,
        cost_class=cost_class, cost_bbox=cost_bbox, cost_giou=cost_giou,
        cost_keypoints=cost_keypoints, cost_oks=cost_oks, focal_alpha=focal_alpha)

    # TODO(synk): scipy.optimize.linear_sum_assignment on host is the production path;
    # there is no clean Pallas equivalent for the sequential augmenting-path algorithm.
    C_np = np.asarray(jax.device_get(C)).reshape(bs, nq, M)
    sums_np = np.asarray(jax.device_get(sums))

    indices, col0 = [], 0
    for i, sz in enumerate(sizes):
        indices.append(_linear_sum_assignment(C_np[i, :, col0:col0 + sz]))
        col0 += sz

    denom = float(N * M)
    cost_mean_dict = {'class': float(sums_np[0] / denom),
                      'bbox': float(sums_np[1] / denom),
                      'giou': float(sums_np[2] / denom),
                      'keypoints': float(sums_np[3] / denom)}

    out_indices = [(np.asarray(i, dtype=np.int64), np.asarray(j, dtype=np.int64))
                   for i, j in indices]
    return out_indices, cost_mean_dict


# --------------------------------------------------------------------------------------
# Pure-JAX reference (mirror of the PyTorch forward's cost computation) for validation
# --------------------------------------------------------------------------------------
def _reference_combined_cost(pred_logits, pred_boxes, pred_keypoints,
                             tgt_ids, tgt_boxes, tgt_keypoints, tgt_area,
                             cost_class=1.0, cost_bbox=1.0, cost_giou=1.0,
                             cost_keypoints=1.0, cost_oks=0.01, focal_alpha=0.25):
    bs, nq, nc = pred_logits.shape
    N = bs * nq
    K = NUM_BODY_POINTS
    prob = jax.nn.sigmoid(pred_logits.reshape(N, nc).astype(jnp.float32))
    neg = (1 - focal_alpha) * prob ** 2 * (-jnp.log(1 - prob + 1e-8))
    pos = focal_alpha * (1 - prob) ** 2 * (-jnp.log(prob + 1e-8))
    c_class = (pos - neg)[:, tgt_ids]

    ob = pred_boxes.reshape(N, 4).astype(jnp.float32)
    tb = tgt_boxes.astype(jnp.float32)
    c_bbox = jnp.sum(jnp.abs(ob[:, None, :] - tb[None, :, :]), -1)

    def xyxy(b):
        cx, cy, w, h = b[..., 0], b[..., 1], b[..., 2], b[..., 3]
        return jnp.stack([cx - 0.5 * w, cy - 0.5 * h, cx + 0.5 * w, cy + 0.5 * h], -1)

    pb, gb = xyxy(ob), xyxy(tb)
    ap = (pb[:, 2] - pb[:, 0]) * (pb[:, 3] - pb[:, 1])
    at = (gb[:, 2] - gb[:, 0]) * (gb[:, 3] - gb[:, 1])
    lt = jnp.maximum(pb[:, None, :2], gb[None, :, :2])
    rb = jnp.minimum(pb[:, None, 2:], gb[None, :, 2:])
    wh = jnp.clip(rb - lt, 0.0)
    inter = wh[..., 0] * wh[..., 1]
    union = ap[:, None] + at[None, :] - inter
    iou = inter / union
    lt2 = jnp.minimum(pb[:, None, :2], gb[None, :, :2])
    rb2 = jnp.maximum(pb[:, None, 2:], gb[None, :, 2:])
    wh2 = jnp.clip(rb2 - lt2, 0.0)
    earea = wh2[..., 0] * wh2[..., 1]
    c_giou = -(iou - (earea - union) / earea)

    ok = pred_keypoints.reshape(N, 3 * K).astype(jnp.float32)
    tk = tgt_keypoints.astype(jnp.float32)
    Zp, Zg, Vg = ok[:, :2 * K], tk[:, :2 * K], tk[:, 2 * K:]
    kp = Zp.reshape(N, K, 2)
    kg = Zg.reshape(-1, K, 2)
    var = jnp.asarray(VARIANCES, jnp.float32)
    sq = ((kp[:, None, :, 0] - kg[None, :, :, 0]) ** 2 +
          (kp[:, None, :, 1] - kg[None, :, :, 1]) ** 2)
    sq0 = sq / (tgt_area.astype(jnp.float32)[None, :, None] * var[None, None, :] * 2.0)
    oks = jnp.sum(jnp.exp(-sq0) * Vg[None], -1) / (jnp.sum(Vg, -1)[None] + 1e-6)
    oks = jnp.clip(oks, 1e-6)
    c_oks = 1.0 - oks
    c_kpt = jnp.sum(jnp.abs(Zp[:, None, :] - Zg[None]) * jnp.repeat(Vg, 2, axis=1)[None], -1)

    use_kpt = jnp.sum(Zp) > 0
    c_bbox_e = jnp.where(use_kpt, 0.0, c_bbox)
    c_giou_e = jnp.where(use_kpt, 0.0, c_giou)
    c_kpt_e = jnp.where(use_kpt, c_kpt, 0.0)
    c_oks_e = jnp.where(use_kpt, c_oks, 0.0)
    C = (cost_class * c_class + cost_bbox * c_bbox_e + cost_giou * c_giou_e +
         cost_keypoints * c_kpt_e + cost_oks * c_oks_e)
    sums = jnp.stack([jnp.sum(c_class), jnp.sum(c_bbox_e),
                      jnp.sum(c_giou_e), jnp.sum(c_kpt_e)])
    return C, sums


if __name__ == "__main__":
    key = jax.random.PRNGKey(0)
    bs, nq, nc = 2, 8, 4
    K = NUM_BODY_POINTS

    ks = jax.random.split(key, 12)
    pred_logits = jax.random.normal(ks[0], (bs, nq, nc), jnp.float32)
    p_cxcy = jax.random.uniform(ks[1], (bs, nq, 2), minval=0.3, maxval=0.7)
    p_wh = jax.random.uniform(ks[2], (bs, nq, 2), minval=0.1, maxval=0.3)
    pred_boxes = jnp.concatenate([p_cxcy, p_wh], axis=-1)
    pred_kp_xy = jax.random.uniform(ks[3], (bs, nq, 2 * K), minval=0.0, maxval=1.0)
    pred_kp_v = jax.random.uniform(ks[4], (bs, nq, K), minval=0.0, maxval=1.0)
    pred_keypoints = jnp.concatenate([pred_kp_xy, pred_kp_v], axis=-1)
    outputs = {'pred_logits': pred_logits, 'pred_boxes': pred_boxes,
               'pred_keypoints': pred_keypoints}

    targets = []
    sizes = [3, 2]
    for i, sz in enumerate(sizes):
        tk = jax.random.split(ks[5 + i], 5)
        labels = jax.random.randint(tk[0], (sz,), 0, nc, dtype=jnp.int32)
        t_cxcy = jax.random.uniform(tk[1], (sz, 2), minval=0.3, maxval=0.7)
        t_wh = jax.random.uniform(tk[2], (sz, 2), minval=0.1, maxval=0.3)
        boxes = jnp.concatenate([t_cxcy, t_wh], axis=-1)
        t_kp_xy = jax.random.uniform(tk[3], (sz, 2 * K), minval=0.0, maxval=1.0)
        t_kp_v = (jax.random.uniform(tk[4], (sz, K)) > 0.3).astype(jnp.float32)
        keypoints = jnp.concatenate([t_kp_xy, t_kp_v], axis=-1)
        area = t_wh[:, 0] * t_wh[:, 1]
        targets.append({'labels': labels, 'boxes': boxes,
                        'keypoints': keypoints, 'area': area})

    # Run the Pallas kernel once and block on its outputs.
    tgt_ids = jnp.concatenate([v['labels'] for v in targets])
    tgt_boxes = jnp.concatenate([v['boxes'] for v in targets])
    tgt_kpts = jnp.concatenate([v['keypoints'] for v in targets])
    tgt_area = jnp.concatenate([v['area'] for v in targets])
    C, sums = hungarian_matcher_combined_cost(pred_logits, pred_boxes, pred_keypoints,
                                              tgt_ids, tgt_boxes, tgt_kpts, tgt_area)
    jax.block_until_ready((C, sums))
    assert C.shape == (bs * nq, int(tgt_ids.shape[0]))
    assert sums.shape == (4,)
    assert bool(jnp.all(jnp.isfinite(C)))

    # Validate against a pure-JAX mirror of the PyTorch reference.
    C_ref, sums_ref = _reference_combined_cost(pred_logits, pred_boxes, pred_keypoints,
                                               tgt_ids, tgt_boxes, tgt_kpts, tgt_area)
    max_err = float(jnp.max(jnp.abs(C - C_ref)))
    assert max_err < 5e-3, f"combined cost mismatch vs reference: {max_err}"
    sums_err = float(jnp.max(jnp.abs(sums - sums_ref)))
    assert sums_err < 1e-2 * (1.0 + float(jnp.max(jnp.abs(sums_ref)))), \
        f"partial sums mismatch vs reference: {sums_err}"

    # Full forward (kernel + host-side Hungarian assignment).
    indices, cost_mean_dict = hungarian_matcher_forward(outputs, targets)
    assert len(indices) == bs
    for (ri, ci), sz in zip(indices, sizes):
        assert ri.shape == (sz,) and ci.shape == (sz,)
    assert set(cost_mean_dict) == {'class', 'bbox', 'giou', 'keypoints'}

    print("KERNEL_OK")
</pallas_src>

<mosaic_0001>
module attributes {stable_mosaic.version = 11 : i64} {
  func.func @_matcher_cost_kernel(%arg0: i32, %arg1: memref<1xi32, #tpu.memory_space<smem>>, %arg2: memref<8x8xf32, #tpu.memory_space<vmem>>, %arg3: memref<8x128xf32, #tpu.memory_space<vmem>>, %arg4: memref<8x4xf32, #tpu.memory_space<vmem>>, %arg5: memref<4x128xf32, #tpu.memory_space<vmem>>, %arg6: memref<8x17xf32, #tpu.memory_space<vmem>>, %arg7: memref<8x17xf32, #tpu.memory_space<vmem>>, %arg8: memref<17x128xf32, #tpu.memory_space<vmem>>, %arg9: memref<17x128xf32, #tpu.memory_space<vmem>>, %arg10: memref<17x128xf32, #tpu.memory_space<vmem>>, %arg11: memref<17x128xf32, #tpu.memory_space<vmem>>, %arg12: memref<1x128xf32, #tpu.memory_space<vmem>>, %arg13: memref<8x128xf32, #tpu.memory_space<vmem>>, %arg14: memref<1x4x128xf32, #tpu.memory_space<vmem>>) attributes {dimension_semantics = [#tpu.dimension_semantics<parallel>], iteration_bounds = array<i64: 2>, scalar_prefetch = 1 : i64, scratch_operands = 0 : i64, tpu.core_type = #tpu.core_type<tc>, window_params = [{transform_indices = @transform_0, window_bounds = array<i64: 8, 8>}, {pipeline_mode = #tpu.pipeline_mode<synchronous>, transform_indices = @transform_1, window_bounds = array<i64: 8, 128>}, {transform_indices = @transform_2, window_bounds = array<i64: 8, 4>}, {pipeline_mode = #tpu.pipeline_mode<synchronous>, transform_indices = @transform_3, window_bounds = array<i64: 4, 128>}, {transform_indices = @transform_4, window_bounds = array<i64: 8, 17>}, {transform_indices = @transform_5, window_bounds = array<i64: 8, 17>}, {pipeline_mode = #tpu.pipeline_mode<synchronous>, transform_indices = @transform_6, window_bounds = array<i64: 17, 128>}, {pipeline_mode = #tpu.pipeline_mode<synchronous>, transform_indices = @transform_7, window_bounds = array<i64: 17, 128>}, {pipeline_mode = #tpu.pipeline_mode<synchronous>, transform_indices = @transform_8, window_bounds = array<i64: 17, 128>}, {pipeline_mode = #tpu.pipeline_mode<synchronous>, transform_indices = @transform_9, window_bounds = array<i64: 17, 128>}, {pipeline_mode = #tpu.pipeline_mode<synchronous>, transform_indices = @transform_10, window_bounds = array<i64: 1, 128>}, {transform_indices = @transform_11, window_bounds = array<i64: 8, 128>}, {transform_indices = @transform_12, window_bounds = array<i64: 1, 4, 128>}]} {
    %c8_i32 = arith.constant 8 : i32
    %0 = arith.muli %arg0, %c8_i32 : i32
    %1 = tpu.iota {dimensions = array<i32: 0>} : vector<8x1xi32>
    %2 = vector.broadcast %0 : i32 to vector<8x1xi32>
    %3 = arith.addi %2, %1 : vector<8x1xi32>
    %4 = tpu.iota {dimensions = array<i32: 1>} : vector<1x128xi32>
    %c16_i32 = arith.constant 16 : i32
    %5 = vector.broadcast %c16_i32 : i32 to vector<8x1xi32>
    %6 = arith.cmpi slt, %3, %5 : vector<8x1xi32>
    %c5_i32 = arith.constant 5 : i32
    %7 = vector.broadcast %c5_i32 : i32 to vector<1x128xi32>
    %8 = arith.cmpi slt, %4, %7 : vector<1x128xi32>
    %9 = vector.broadcast %6 : vector<8x1xi1> to vector<8x128xi1>
    %10 = vector.broadcast %8 : vector<1x128xi1> to vector<8x128xi1>
    %11 = arith.andi %9, %10 : vector<8x128xi1>
    %c0 = arith.constant 0 : index
    %c0_0 = arith.constant 0 : index
    %12 = vector.load %arg2[%c0, %c0_0] : memref<8x8xf32, #tpu.memory_space<vmem>>, vector<8x8xf32>
    %c0_1 = arith.constant 0 : index
    %c0_2 = arith.constant 0 : index
    %13 = vector.load %arg3[%c0_1, %c0_2] : memref<8x128xf32, #tpu.memory_space<vmem>>, vector<8x128xf32>
    %cst = arith.constant dense<0.000000e+00> : vector<8x128xf32>
    %14 = tpu.matmul %12, %13, %cst {dimension_numbers = #tpu.dot_dimension_numbers<[1], [0], [0], [1], [0, 0, 1, 1], [], []>} : vector<8x8xf32>, vector<8x128xf32>, vector<8x128xf32> -> vector<8x128xf32>
    %15 = arith.negf %14 : vector<8x128xf32>
    %16 = math.exp %15 : vector<8x128xf32>
    %cst_3 = arith.constant 1.000000e+00 : f32
    %17 = vector.broadcast %cst_3 : f32 to vector<8x128xf32>
    %18 = arith.addf %17, %16 : vector<8x128xf32>
    %19 = arith.divf %17, %18 : vector<8x128xf32>
    %cst_4 = arith.constant 1.000000e+00 : f32
    %20 = vector.broadcast %cst_4 : f32 to vector<8x128xf32>
    %21 = arith.subf %20, %19 : vector<8x128xf32>
    %22 = arith.mulf %19, %19 : vector<8x128xf32>
    %cst_5 = arith.constant 7.500000e-01 : f32
    %23 = vector.broadcast %cst_5 : f32 to vector<8x128xf32>
    %24 = arith.mulf %23, %22 : vector<8x128xf32>
    %cst_6 = arith.constant 9.99999993E-9 : f32
    %25 = vector.broadcast %cst_6 : f32 to vector<8x128xf32>
    %26 = arith.addf %21, %25 : vector<8x128xf32>
    %27 = math.log %26 : vector<8x128xf32>
    %cst_7 = arith.constant 0.000000e+00 : f32
    %28 = vector.broadcast %cst_7 : f32 to vector<8x128xf32>
    %29 = arith.subf %28, %27 : vector<8x128xf32>
    %30 = arith.mulf %24, %29 : vector<8x128xf32>
    %31 = arith.mulf %21, %21 : vector<8x128xf32>
    %cst_8 = arith.constant 2.500000e-01 : f32
    %32 = vector.broadcast %cst_8 : f32 to vector<8x128xf32>
    %33 = arith.mulf %32, %31 : vector<8x128xf32>
    %cst_9 = arith.constant 9.99999993E-9 : f32
    %34 = vector.broadcast %cst_9 : f32 to vector<8x128xf32>
    %35 = arith.addf %19, %34 : vector<8x128xf32>
    %36 = math.log %35 : vector<8x128xf32>
    %cst_10 = arith.constant 0.000000e+00 : f32
    %37 = vector.broadcast %cst_10 : f32 to vector<8x128xf32>
    %38 = arith.subf %37, %36 : vector<8x128xf32>
    %39 = arith.mulf %33, %38 : vector<8x128xf32>
    %40 = arith.subf %39, %30 : vector<8x128xf32>
    %cst_11 = arith.constant 1.000000e+00 : f32
    %41 = vector.broadcast %cst_11 : f32 to vector<8x128xf32>
    %42 = arith.mulf %41, %40 : vector<8x128xf32>
    %c0_12 = arith.constant 0 : index
    %c0_13 = arith.constant 0 : index
    %43 = vector.load %arg13[%c0_12, %c0_13] : memref<8x128xf32, #tpu.memory_space<vmem>>, vector<8x128xf32>
    tpu.vector_store %arg13[%c0_12, %c0_13], %42 {strides = array<i32>} : memref<8x128xf32, #tpu.memory_space<vmem>>, vector<8x128xf32>,
    %cst_14 = arith.constant 0.000000e+00 : f32
    %44 = vector.broadcast %cst_14 : f32 to vector<1x128xf32>
    %cst_15 = arith.constant 0.000000e+00 : f32
    %45 = vector.broadcast %cst_15 : f32 to vector<8x128xf32>
    %46 = arith.select %11, %40, %45 : vector<8x128xi1>, vector<8x128xf32>
    %cst_16 = arith.constant dense<0.000000e+00> : vector<128xf32>
    %47 = vector.multi_reduction <add>, %46, %cst_16 [0] : vector<8x128xf32> to vector<128xf32>
    %48 = vector.shape_cast %47 : vector<128xf32> to vector<1x128xf32>
    %49 = tpu.concatenate %48, %44, %44, %44 in 0 : vector<1x128xf32>, vector<1x128xf32>, vector<1x128xf32>, vector<1x128xf32> -> vector<4x128xf32>
    %c0_17 = arith.constant 0 : index
    %c0_18 = arith.constant 0 : index
    %c0_19 = arith.constant 0 : index
    %50 = vector.load %arg14[%c0_17, %c0_18, %c0_19] : memref<1x4x128xf32, #tpu.memory_space<vmem>>, vector<1x4x128xf32>
    %51 = vector.shape_cast %50 : vector<1x4x128xf32> to vector<4x128xf32>
    %52 = vector.shape_cast %49 : vector<4x128xf32> to vector<1x4x128xf32>
    tpu.vector_store %arg14[%c0_17, %c0_18, %c0_19], %52 {strides = array<i32>} : memref<1x4x128xf32, #tpu.memory_space<vmem>>, vector<1x4x128xf32>,
    %c0_20 = arith.constant 0 : index
    %53 = memref.load %arg1[%c0_20] : memref<1xi32, #tpu.memory_space<smem>>
    %c0_i32 = arith.constant 0 : i32
    %54 = arith.cmpi eq, %53, %c0_i32 : i32
    %55 = arith.extui %54 : i1 to i32
    %c0_i32_21 = arith.constant 0 : i32
    %56 = arith.cmpi ne, %55, %c0_i32_21 : i32
    scf.if %56 {
      %c0_25 = arith.constant 0 : index
      %c0_26 = arith.constant 0 : index
      %61 = vector.load %arg4[%c0_25, %c0_26] : memref<8x4xf32, #tpu.memory_space<vmem>>, vector<8x4xf32>
      %c0_27 = arith.constant 0 : index
      %c0_28 = arith.constant 0 : index
      %62 = vector.load %arg5[%c0_27, %c0_28] : memref<4x128xf32, #tpu.memory_space<vmem>>, vector<4x128xf32>
      %63 = vector.extract_strided_slice %61 {offsets = [0, 0], sizes = [8, 1], strides = [1, 1]} : vector<8x4xf32> to vector<8x1xf32>
      %64 = vector.extract_strided_slice %61 {offsets = [0, 1], sizes = [8, 1], strides = [1, 1]} : vector<8x4xf32> to vector<8x1xf32>
      %65 = vector.extract_strided_slice %61 {offsets = [0, 2], sizes = [8, 1], strides = [1, 1]} : vector<8x4xf32> to vector<8x1xf32>
      %66 = vector.extract_strided_slice %61 {offsets = [0, 3], sizes = [8, 1], strides = [1, 1]} : vector<8x4xf32> to vector<8x1xf32>
      %67 = vector.extract_strided_slice %62 {offsets = [0, 0], sizes = [1, 128], strides = [1, 1]} : vector<4x128xf32> to vector<1x128xf32>
      %68 = vector.extract_strided_slice %62 {offsets = [1, 0], sizes = [1, 128], strides = [1, 1]} : vector<4x128xf32> to vector<1x128xf32>
      %69 = vector.extract_strided_slice %62 {offsets = [2, 0], sizes = [1, 128], strides = [1, 1]} : vector<4x128xf32> to vector<1x128xf32>
      %70 = vector.extract_strided_slice %62 {offsets = [3, 0], sizes = [1, 128], strides = [1, 1]} : vector<4x128xf32> to vector<1x128xf32>
      %71 = vector.broadcast %63 : vector<8x1xf32> to vector<8x128xf32>
      %72 = vector.broadcast %67 : vector<1x128xf32> to vector<8x128xf32>
      %73 = arith.subf %71, %72 : vector<8x128xf32>
      %74 = math.absf %73 : vector<8x128xf32>
      %75 = vector.broadcast %64 : vector<8x1xf32> to vector<8x128xf32>
      %76 = vector.broadcast %68 : vector<1x128xf32> to vector<8x128xf32>
      %77 = arith.subf %75, %76 : vector<8x128xf32>
      %78 = math.absf %77 : vector<8x128xf32>
      %79 = arith.addf %74, %78 : vector<8x128xf32>
      %80 = vector.broadcast %65 : vector<8x1xf32> to vector<8x128xf32>
      %81 = vector.broadcast %69 : vector<1x128xf32> to vector<8x128xf32>
      %82 = arith.subf %80, %81 : vector<8x128xf32>
      %83 = math.absf %82 : vector<8x128xf32>
      %84 = arith.addf %79, %83 : vector<8x128xf32>
      %85 = vector.broadcast %66 : vector<8x1xf32> to vector<8x128xf32>
      %86 = vector.broadcast %70 : vector<1x128xf32> to vector<8x128xf32>
      %87 = arith.subf %85, %86 : vector<8x128xf32>
      %88 = math.absf %87 : vector<8x128xf32>
      %89 = arith.addf %84, %88 : vector<8x128xf32>
      %cst_29 = arith.constant 5.000000e-01 : f32
      %90 = vector.broadcast %cst_29 : f32 to vector<8x1xf32>
      %91 = arith.mulf %90, %65 : vector<8x1xf32>
      %92 = arith.subf %63, %91 : vector<8x1xf32>
      %cst_30 = arith.constant 5.000000e-01 : f32
      %93 = vector.broadcast %cst_30 : f32 to vector<8x1xf32>
      %94 = arith.mulf %93, %66 : vector<8x1xf32>
      %95 = arith.subf %64, %94 : vector<8x1xf32>
      %cst_31 = arith.constant 5.000000e-01 : f32
      %96 = vector.broadcast %cst_31 : f32 to vector<8x1xf32>
      %97 = arith.mulf %96, %65 : vector<8x1xf32>
      %98 = arith.addf %63, %97 : vector<8x1xf32>
      %cst_32 = arith.constant 5.000000e-01 : f32
      %99 = vector.broadcast %cst_32 : f32 to vector<8x1xf32>
      %100 = arith.mulf %99, %66 : vector<8x1xf32>
      %101 = arith.addf %64, %100 : vector<8x1xf32>
      %cst_33 = arith.constant 5.000000e-01 : f32
      %102 = vector.broadcast %cst_33 : f32 to vector<1x128xf32>
      %103 = arith.mulf %102, %69 : vector<1x128xf32>
      %104 = arith.subf %67, %103 : vector<1x128xf32>
      %cst_34 = arith.constant 5.000000e-01 : f32
      %105 = vector.broadcast %cst_34 : f32 to vector<1x128xf32>
      %106 = arith.mulf %105, %70 : vector<1x128xf32>
      %107 = arith.subf %68, %106 : vector<1x128xf32>
      %cst_35 = arith.constant 5.000000e-01 : f32
      %108 = vector.broadcast %cst_35 : f32 to vector<1x128xf32>
      %109 = arith.mulf %108, %69 : vector<1x128xf32>
      %110 = arith.addf %67, %109 : vector<1x128xf32>
      %cst_36 = arith.constant 5.000000e-01 : f32
      %111 = vector.broadcast %cst_36 : f32 to vector<1x128xf32>
      %112 = arith.mulf %111, %70 : vector<1x128xf32>
      %113 = arith.addf %68, %112 : vector<1x128xf32>
      %114 = arith.subf %98, %92 : vector<8x1xf32>
      %115 = arith.subf %101, %95 : vector<8x1xf32>
      %116 = arith.mulf %114, %115 : vector<8x1xf32>
      %117 = arith.subf %110, %104 : vector<1x128xf32>
      %118 = arith.subf %113, %107 : vector<1x128xf32>
      %119 = arith.mulf %117, %118 : vector<1x128xf32>
      %120 = vector.broadcast %98 : vector<8x1xf32> to vector<8x128xf32>
      %121 = vector.broadcast %110 : vector<1x128xf32> to vector<8x128xf32>
      %122 = arith.minimumf %120, %121 : vector<8x128xf32>
      %123 = vector.broadcast %92 : vector<8x1xf32> to vector<8x128xf32>
      %124 = vector.broadcast %104 : vector<1x128xf32> to vector<8x128xf32>
      %125 = arith.maximumf %123, %124 : vector<8x128xf32>
      %126 = arith.subf %122, %125 : vector<8x128xf32>
      %cst_37 = arith.constant 0.000000e+00 : f32
      %127 = vector.broadcast %cst_37 : f32 to vector<8x128xf32>
      %128 = arith.maximumf %126, %127 : vector<8x128xf32>
      %129 = vector.broadcast %101 : vector<8x1xf32> to vector<8x128xf32>
      %130 = vector.broadcast %113 : vector<1x128xf32> to vector<8x128xf32>
      %131 = arith.minimumf %129, %130 : vector<8x128xf32>
      %132 = vector.broadcast %95 : vector<8x1xf32> to vector<8x128xf32>
      %133 = vector.broadcast %107 : vector<1x128xf32> to vector<8x128xf32>
      %134 = arith.maximumf %132, %133 : vector<8x128xf32>
      %135 = arith.subf %131, %134 : vector<8x128xf32>
      %cst_38 = arith.constant 0.000000e+00 : f32
      %136 = vector.broadcast %cst_38 : f32 to vector<8x128xf32>
      %137 = arith.maximumf %135, %136 : vector<8x128xf32>
      %138 = arith.mulf %128, %137 : vector<8x128xf32>
      %139 = vector.broadcast %116 : vector<8x1xf32> to vector<8x128xf32>
      %140 = vector.broadcast %119 : vector<1x128xf32> to vector<8x128xf32>
      %141 = arith.addf %139, %140 : vector<8x128xf32>
      %142 = arith.subf %141, %138 : vector<8x128xf32>
      %143 = tpu.reciprocal %142 {approx = true} : vector<8x128xf32> -> vector<8x128xf32>
      %144 = arith.mulf %138, %143 : vector<8x128xf32>
      %145 = vector.broadcast %98 : vector<8x1xf32> to vector<8x128xf32>
      %146 = vector.broadcast %110 : vector<1x128xf32> to vector<8x128xf32>
      %147 = arith.maximumf %145, %146 : vector<8x128xf32>
      %148 = vector.broadcast %92 : vector<8x1xf32> to vector<8x128xf32>
      %149 = vector.broadcast %104 : vector<1x128xf32> to vector<8x128xf32>
      %150 = arith.minimumf %148, %149 : vector<8x128xf32>
      %151 = arith.subf %147, %150 : vector<8x128xf32>
      %cst_39 = arith.constant 0.000000e+00 : f32
      %152 = vector.broadcast %cst_39 : f32 to vector<8x128xf32>
      %153 = arith.maximumf %151, %152 : vector<8x128xf32>
      %154 = vector.broadcast %101 : vector<8x1xf32> to vector<8x128xf32>
      %155 = vector.broadcast %113 : vector<1x128xf32> to vector<8x128xf32>
      %156 = arith.maximumf %154, %155 : vector<8x128xf32>
      %157 = vector.broadcast %95 : vector<8x1xf32> to vector<8x128xf32>
      %158 = vector.broadcast %107 : vector<1x128xf32> to vector<8x128xf32>
      %159 = arith.minimumf %157, %158 : vector<8x128xf32>
      %160 = arith.subf %156, %159 : vector<8x128xf32>
      %cst_40 = arith.constant 0.000000e+00 : f32
      %161 = vector.broadcast %cst_40 : f32 to vector<8x128xf32>
      %162 = arith.maximumf %160, %161 : vector<8x128xf32>
      %163 = arith.mulf %153, %162 : vector<8x128xf32>
      %164 = arith.subf %163, %142 : vector<8x128xf32>
      %165 = tpu.reciprocal %163 {approx = true} : vector<8x128xf32> -> vector<8x128xf32>
      %166 = arith.mulf %164, %165 : vector<8x128xf32>
      %167 = arith.subf %144, %166 : vector<8x128xf32>
      %cst_41 = arith.constant 0.000000e+00 : f32
      %168 = vector.broadcast %cst_41 : f32 to vector<8x128xf32>
      %169 = arith.subf %168, %167 : vector<8x128xf32>
      %c0_42 = arith.constant 0 : index
      %c0_43 = arith.constant 0 : index
      %170 = vector.load %arg13[%c0_42, %c0_43] : memref<8x128xf32, #tpu.memory_space<vmem>>, vector<8x128xf32>
      %cst_44 = arith.constant 1.000000e+00 : f32
      %171 = vector.broadcast %cst_44 : f32 to vector<8x128xf32>
      %172 = arith.mulf %171, %89 : vector<8x128xf32>
      %cst_45 = arith.constant 1.000000e+00 : f32
      %173 = vector.broadcast %cst_45 : f32 to vector<8x128xf32>
      %174 = arith.mulf %173, %169 : vector<8x128xf32>
      %175 = arith.addf %172, %174 : vector<8x128xf32>
      %176 = arith.addf %170, %175 : vector<8x128xf32>
      %c0_46 = arith.constant 0 : index
      %c0_47 = arith.constant 0 : index
      %177 = vector.load %arg13[%c0_46, %c0_47] : memref<8x128xf32, #tpu.memory_space<vmem>>, vector<8x128xf32>
      tpu.vector_store %arg13[%c0_46, %c0_47], %176 {strides = array<i32>} : memref<8x128xf32, #tpu.memory_space<vmem>>, vector<8x128xf32>,
      %cst_48 = arith.constant 0.000000e+00 : f32
      %178 = vector.broadcast %cst_48 : f32 to vector<8x128xf32>
      %179 = arith.select %11, %89, %178 : vector<8x128xi1>, vector<8x128xf32>
      %cst_49 = arith.constant dense<0.000000e+00> : vector<128xf32>
      %180 = vector.multi_reduction <add>, %179, %cst_49 [0] : vector<8x128xf32> to vector<128xf32>
      %181 = vector.shape_cast %180 : vector<128xf32> to vector<1x128xf32>
      %c0_50 = arith.constant 0 : index
      %c1 = arith.constant 1 : index
      %c0_51 = arith.constant 0 : index
      %182 = vector.load %arg14[%c0_50, %c1, %c0_51] : memref<1x4x128xf32, #tpu.memory_space<vmem>>, vector<1x1x128xf32>
      %183 = vector.shape_cast %182 : vector<1x1x128xf32> to vector<1x128xf32>
      %184 = vector.shape_cast %181 : vector<1x128xf32> to vector<1x1x128xf32>
      tpu.vector_store %arg14[%c0_50, %c1, %c0_51], %184 {strides = array<i32>} : memref<1x4x128xf32, #tpu.memory_space<vmem>>, vector<1x1x128xf32>,
      %cst_52 = arith.constant 0.000000e+00 : f32
      %185 = vector.broadcast %cst_52 : f32 to vector<8x128xf32>
      %186 = arith.select %11, %169, %185 : vector<8x128xi1>, vector<8x128xf32>
      %cst_53 = arith.constant dense<0.000000e+00> : vector<128xf32>
      %187 = vector.multi_reduction <add>, %186, %cst_53 [0] : vector<8x128xf32> to vector<128xf32>
      %188 = vector.shape_cast %187 : vector<128xf32> to vector<1x128xf32>
      %c0_54 = arith.constant 0 : index
      %c2 = arith.constant 2 : index
      %c0_55 = arith.constant 0 : index
      %189 = vector.load %arg14[%c0_54, %c2, %c0_55] : memref<1x4x128xf32, #tpu.memory_space<vmem>>, vector<1x1x128xf32>
      %190 = vector.shape_cast %189 : vector<1x1x128xf32> to vector<1x128xf32>
      %191 = vector.shape_cast %188 : vector<1x128xf32> to vector<1x1x128xf32>
      tpu.vector_store %arg14[%c0_54, %c2, %c0_55], %191 {strides = array<i32>} : memref<1x4x128xf32, #tpu.memory_space<vmem>>, vector<1x1x128xf32>,
    } else {
    }
    %c0_22 = arith.constant 0 : index
    %57 = memref.load %arg1[%c0_22] : memref<1xi32, #tpu.memory_space<smem>>
    %c0_i32_23 = arith.constant 0 : i32
    %58 = arith.cmpi sgt, %57, %c0_i32_23 : i32
    %59 = arith.extui %58 : i1 to i32
    %c0_i32_24 = arith.constant 0 : i32
    %60 = arith.cmpi ne, %59, %c0_i32_24 : i32
    scf.if %60 {
      %c0_25 = arith.constant 0 : index
      %c0_26 = arith.constant 0 : index
      %61 = vector.load %arg6[%c0_25, %c0_26] : memref<8x17xf32, #tpu.memory_space<vmem>>, vector<8x17xf32>
      %c0_27 = arith.constant 0 : index
      %c0_28 = arith.constant 0 : index
      %62 = vector.load %arg7[%c0_27, %c0_28] : memref<8x17xf32, #tpu.memory_space<vmem>>, vector<8x17xf32>
      %c0_29 = arith.constant 0 : index
      %c0_30 = arith.constant 0 : index
      %63 = vector.load %arg8[%c0_29, %c0_30] : memref<17x128xf32, #tpu.memory_space<vmem>>, vector<17x128xf32>
      %c0_31 = arith.constant 0 : index
      %c0_32 = arith.constant 0 : index
      %64 = vector.load %arg9[%c0_31, %c0_32] : memref<17x128xf32, #tpu.memory_space<vmem>>, vector<17x128xf32>
      %c0_33 = arith.constant 0 : index
      %c0_34 = arith.constant 0 : index
      %65 = vector.load %arg10[%c0_33, %c0_34] : memref<17x128xf32, #tpu.memory_space<vmem>>, vector<17x128xf32>
      %c0_35 = arith.constant 0 : index
      %c0_36 = arith.constant 0 : index
      %66 = vector.load %arg11[%c0_35, %c0_36] : memref<17x128xf32, #tpu.memory_space<vmem>>, vector<17x128xf32>
      %cst_37 = arith.constant 0.000000e+00 : f32
      %67 = vector.broadcast %cst_37 : f32 to vector<8x128xf32>
      %cst_38 = arith.constant 0.000000e+00 : f32
      %68 = vector.broadcast %cst_38 : f32 to vector<8x128xf32>
      %69 = vector.extract_strided_slice %61 {offsets = [0, 0], sizes = [8, 1], strides = [1, 1]} : vector<8x17xf32> to vector<8x1xf32>
      %70 = vector.extract_strided_slice %63 {offsets = [0, 0], sizes = [1, 128], strides = [1, 1]} : vector<17x128xf32> to vector<1x128xf32>
      %71 = vector.broadcast %69 : vector<8x1xf32> to vector<8x128xf32>
      %72 = vector.broadcast %70 : vector<1x128xf32> to vector<8x128xf32>
      %73 = arith.subf %71, %72 : vector<8x128xf32>
      %74 = vector.extract_strided_slice %62 {offsets = [0, 0], sizes = [8, 1], strides = [1, 1]} : vector<8x17xf32> to vector<8x1xf32>
      %75 = vector.extract_strided_slice %64 {offsets = [0, 0], sizes = [1, 128], strides = [1, 1]} : vector<17x128xf32> to vector<1x128xf32>
      %76 = vector.broadcast %74 : vector<8x1xf32> to vector<8x128xf32>
      %77 = vector.broadcast %75 : vector<1x128xf32> to vector<8x128xf32>
      %78 = arith.subf %76, %77 : vector<8x128xf32>
      %79 = vector.extract_strided_slice %65 {offsets = [0, 0], sizes = [1, 128], strides = [1, 1]} : vector<17x128xf32> to vector<1x128xf32>
      %80 = arith.mulf %73, %73 : vector<8x128xf32>
      %81 = arith.mulf %78, %78 : vector<8x128xf32>
      %82 = arith.addf %80, %81 : vector<8x128xf32>
      %83 = vector.extract_strided_slice %66 {offsets = [0, 0], sizes = [1, 128], strides = [1, 1]} : vector<17x128xf32> to vector<1x128xf32>
      %84 = vector.broadcast %83 : vector<1x128xf32> to vector<8x128xf32>
      %85 = arith.mulf %82, %84 : vector<8x128xf32>
      %cst_39 = arith.constant 0.000000e+00 : f32
      %86 = vector.broadcast %cst_39 : f32 to vector<8x128xf32>
      %87 = arith.subf %86, %85 : vector<8x128xf32>
      %88 = math.exp %87 : vector<8x128xf32>
      %89 = vector.broadcast %79 : vector<1x128xf32> to vector<8x128xf32>
      %90 = arith.mulf %88, %89 : vector<8x128xf32>
      %91 = arith.addf %68, %90 : vector<8x128xf32>
      %92 = math.absf %73 : vector<8x128xf32>
      %93 = math.absf %78 : vector<8x128xf32>
      %94 = arith.addf %92, %93 : vector<8x128xf32>
      %95 = vector.broadcast %79 : vector<1x128xf32> to vector<8x128xf32>
      %96 = arith.mulf %94, %95 : vector<8x128xf32>
      %97 = arith.addf %67, %96 : vector<8x128xf32>
      %98 = vector.extract_strided_slice %61 {offsets = [0, 1], sizes = [8, 1], strides = [1, 1]} : vector<8x17xf32> to vector<8x1xf32>
      %99 = vector.extract_strided_slice %63 {offsets = [1, 0], sizes = [1, 128], strides = [1, 1]} : vector<17x128xf32> to vector<1x128xf32>
      %100 = vector.broadcast %98 : vector<8x1xf32> to vector<8x128xf32>
      %101 = vector.broadcast %99 : vector<1x128xf32> to vector<8x128xf32>
      %102 = arith.subf %100, %101 : vector<8x128xf32>
      %103 = vector.extract_strided_slice %62 {offsets = [0, 1], sizes = [8, 1], strides = [1, 1]} : vector<8x17xf32> to vector<8x1xf32>
      %104 = vector.extract_strided_slice %64 {offsets = [1, 0], sizes = [1, 128], strides = [1, 1]} : vector<17x128xf32> to vector<1x128xf32>
      %105 = vector.broadcast %103 : vector<8x1xf32> to vector<8x128xf32>
      %106 = vector.broadcast %104 : vector<1x128xf32> to vector<8x128xf32>
      %107 = arith.subf %105, %106 : vector<8x128xf32>
      %108 = vector.extract_strided_slice %65 {offsets = [1, 0], sizes = [1, 128], strides = [1, 1]} : vector<17x128xf32> to vector<1x128xf32>
      %109 = arith.mulf %102, %102 : vector<8x128xf32>
      %110 = arith.mulf %107, %107 : vector<8x128xf32>
      %111 = arith.addf %109, %110 : vector<8x128xf32>
      %112 = vector.extract_strided_slice %66 {offsets = [1, 0], sizes = [1, 128], strides = [1, 1]} : vector<17x128xf32> to vector<1x128xf32>
      %113 = vector.broadcast %112 : vector<1x128xf32> to vector<8x128xf32>
      %114 = arith.mulf %111, %113 : vector<8x128xf32>
      %cst_40 = arith.constant 0.000000e+00 : f32
      %115 = vector.broadcast %cst_40 : f32 to vector<8x128xf32>
      %116 = arith.subf %115, %114 : vector<8x128xf32>
      %117 = math.exp %116 : vector<8x128xf32>
      %118 = vector.broadcast %108 : vector<1x128xf32> to vector<8x128xf32>
      %119 = arith.mulf %117, %118 : vector<8x128xf32>
      %120 = arith.addf %91, %119 : vector<8x128xf32>
      %121 = math.absf %102 : vector<8x128xf32>
      %122 = math.absf %107 : vector<8x128xf32>
      %123 = arith.addf %121, %122 : vector<8x128xf32>
      %124 = vector.broadcast %108 : vector<1x128xf32> to vector<8x128xf32>
      %125 = arith.mulf %123, %124 : vector<8x128xf32>
      %126 = arith.addf %97, %125 : vector<8x128xf32>
      %127 = vector.extract_strided_slice %61 {offsets = [0, 2], sizes = [8, 1], strides = [1, 1]} : vector<8x17xf32> to vector<8x1xf32>
      %128 = vector.extract_strided_slice %63 {offsets = [2, 0], sizes = [1, 128], strides = [1, 1]} : vector<17x128xf32> to vector<1x128xf32>
      %129 = vector.broadcast %127 : vector<8x1xf32> to vector<8x128xf32>
      %130 = vector.broadcast %128 : vector<1x128xf32> to vector<8x128xf32>
      %131 = arith.subf %129, %130 : vector<8x128xf32>
      %132 = vector.extract_strided_slice %62 {offsets = [0, 2], sizes = [8, 1], strides = [1, 1]} : vector<8x17xf32> to vector<8x1xf32>
      %133 = vector.extract_strided_slice %64 {offsets = [2, 0], sizes = [1, 128], strides = [1, 1]} : vector<17x128xf32> to vector<1x128xf32>
      %134 = vector.broadcast %132 : vector<8x1xf32> to vector<8x128xf32>
      %135 = vector.broadcast %133 : vector<1x128xf32> to vector<8x128xf32>
      %136 = arith.subf %134, %135 : vector<8x128xf32>
      %137 = vector.extract_strided_slice %65 {offsets = [2, 0], sizes = [1, 128], strides = [1, 1]} : vector<17x128xf32> to vector<1x128xf32>
      %138 = arith.mulf %131, %131 : vector<8x128xf32>
      %139 = arith.mulf %136, %136 : vector<8x128xf32>
      %140 = arith.addf %138, %139 : vector<8x128xf32>
      %141 = vector.extract_strided_slice %66 {offsets = [2, 0], sizes = [1, 128], strides = [1, 1]} : vector<17x128xf32> to vector<1x128xf32>
      %142 = vector.broadcast %141 : vector<1x128xf32> to vector<8x128xf32>
      %143 = arith.mulf %140, %142 : vector<8x128xf32>
      %cst_41 = arith.constant 0.000000e+00 : f32
      %144 = vector.broadcast %cst_41 : f32 to vector<8x128xf32>
      %145 = arith.subf %144, %143 : vector<8x128xf32>
      %146 = math.exp %145 : vector<8x128xf32>
      %147 = vector.broadcast %137 : vector<1x128xf32> to vector<8x128xf32>
      %148 = arith.mulf %146, %147 : vector<8x128xf32>
      %149 = arith.addf %120, %148 : vector<8x128xf32>
      %150 = math.absf %131 : vector<8x128xf32>
      %151 = math.absf %136 : vector<8x128xf32>
      %152 = arith.addf %150, %151 : vector<8x128xf32>
      %153 = vector.broadcast %137 : vector<1x128xf32> to vector<8x128xf32>
      %154 = arith.mulf %152, %153 : vector<8x128xf32>
      %155 = arith.addf %126, %154 : vector<8x128xf32>
      %156 = vector.extract_strided_slice %61 {offsets = [0, 3], sizes = [8, 1], strides = [1, 1]} : vector<8x17xf32> to vector<8x1xf32>
      %157 = vector.extract_strided_slice %63 {offsets = [3, 0], sizes = [1, 128], strides = [1, 1]} : vector<17x128xf32> to vector<1x128xf32>
      %158 = vector.broadcast %156 : vector<8x1xf32> to vector<8x128xf32>
      %159 = vector.broadcast %157 : vector<1x128xf32> to vector<8x128xf32>
      %160 = arith.subf %158, %159 : vector<8x128xf32>
      %161 = vector.extract_strided_slice %62 {offsets = [0, 3], sizes = [8, 1], strides = [1, 1]} : vector<8x17xf32> to vector<8x1xf32>
      %162 = vector.extract_strided_slice %64 {offsets = [3, 0], sizes = [1, 128], strides = [1, 1]} : vector<17x128xf32> to vector<1x128xf32>
      %163 = vector.broadcast %161 : vector<8x1xf32> to vector<8x128xf32>
      %164 = vector.broadcast %162 : vector<1x128xf32> to vector<8x128xf32>
      %165 = arith.subf %163, %164 : vector<8x128xf32>
      %166 = vector.extract_strided_slice %65 {offsets = [3, 0], sizes = [1, 128], strides = [1, 1]} : vector<17x128xf32> to vector<1x128xf32>
      %167 = arith.mulf %160, %160 : vector<8x128xf32>
      %168 = arith.mulf %165, %165 : vector<8x128xf32>
      %169 = arith.addf %167, %168 : vector<8x128xf32>
      %170 = vector.extract_strided_slice %66 {offsets = [3, 0], sizes = [1, 128], strides = [1, 1]} : vector<17x128xf32> to vector<1x128xf32>
      %171 = vector.broadcast %170 : vector<1x128xf32> to vector<8x128xf32>
      %172 = arith.mulf %169, %171 : vector<8x128xf32>
      %cst_42 = arith.constant 0.000000e+00 : f32
      %173 = vector.broadcast %cst_42 : f32 to vector<8x128xf32>
      %174 = arith.subf %173, %172 : vector<8x128xf32>
      %175 = math.exp %174 : vector<8x128xf32>
      %176 = vector.broadcast %166 : vector<1x128xf32> to vector<8x128xf32>
      %177 = arith.mulf %175, %176 : vector<8x128xf32>
      %178 = arith.addf %149, %177 : vector<8x128xf32>
      %179 = math.absf %160 : vector<8x128xf32>
      %180 = math.absf %165 : vector<8x128xf32>
      %181 = arith.addf %179, %180 : vector<8x128xf32>
      %182 = vector.broadcast %166 : vector<1x128xf32> to vector<8x128xf32>
      %183 = arith.mulf %181, %182 : vector<8x128xf32>
      %184 = arith.addf %155, %183 : vector<8x128xf32>
      %185 = vector.extract_strided_slice %61 {offsets = [0, 4], sizes = [8, 1], strides = [1, 1]} : vector<8x17xf32> to vector<8x1xf32>
      %186 = vector.extract_strided_slice %63 {offsets = [4, 0], sizes = [1, 128], strides = [1, 1]} : vector<17x128xf32> to vector<1x128xf32>
      %187 = vector.broadcast %185 : vector<8x1xf32> to vector<8x128xf32>
      %188 = vector.broadcast %186 : vector<1x128xf32> to vector<8x128xf32>
      %189 = arith.subf %187, %188 : vector<8x128xf32>
      %190 = vector.extract_strided_slice %62 {offsets = [0, 4], sizes = [8, 1], strides = [1, 1]} : vector<8x17xf32> to vector<8x1xf32>
      %191 = vector.extract_strided_slice %64 {offsets = [4, 0], sizes = [1, 128], strides = [1, 1]} : vector<17x128xf32> to vector<1x128xf32>
      %192 = vector.broadcast %190 : vector<8x1xf32> to vector<8x128xf32>
      %193 = vector.broadcast %191 : vector<1x128xf32> to vector<8x128xf32>
      %194 = arith.subf %192, %193 : vector<8x128xf32>
      %195 = vector.extract_strided_slice %65 {offsets = [4, 0], sizes = [1, 128], strides = [1, 1]} : vector<17x128xf32> to vector<1x128xf32>
      %196 = arith.mulf %189, %189 : vector<8x128xf32>
      %197 = arith.mulf %194, %194 : vector<8x128xf32>
      %198 = arith.addf %196, %197 : vector<8x128xf32>
      %199 = vector.extract_strided_slice %66 {offsets = [4, 0], sizes = [1, 128], strides = [1, 1]} : vector<17x128xf32> to vector<1x128xf32>
      %200 = vector.broadcast %199 : vector<1x128xf32> to vector<8x128xf32>
      %201 = arith.mulf %198, %200 : vector<8x128xf32>
      %cst_43 = arith.constant 0.000000e+00 : f32
      %202 = vector.broadcast %cst_43 : f32 to vector<8x128xf32>
      %203 = arith.subf %202, %201 : vector<8x128xf32>
      %204 = math.exp %203 : vector<8x128xf32>
      %205 = vector.broadcast %195 : vector<1x128xf32> to vector<8x128xf32>
      %206 = arith.mulf %204, %205 : vector<8x128xf32>
      %207 = arith.addf %178, %206 : vector<8x128xf32>
      %208 = math.absf %189 : vector<8x128xf32>
      %209 = math.absf %194 : vector<8x128xf32>
      %210 = arith.addf %208, %209 : vector<8x128xf32>
      %211 = vector.broadcast %195 : vector<1x128xf32> to vector<8x128xf32>
      %212 = arith.mulf %210, %211 : vector<8x128xf32>
      %213 = arith.addf %184, %212 : vector<8x128xf32>
      %214 = vector.extract_strided_slice %61 {offsets = [0, 5], sizes = [8, 1], strides = [1, 1]} : vector<8x17xf32> to vector<8x1xf32>
      %215 = vector.extract_strided_slice %63 {offsets = [5, 0], sizes = [1, 128], strides = [1, 1]} : vector<17x128xf32> to vector<1x128xf32>
      %216 = vector.broadcast %214 : vector<8x1xf32> to vector<8x128xf32>
      %217 = vector.broadcast %215 : vector<1x128xf32> to vector<8x128xf32>
      %218 = arith.subf %216, %217 : vector<8x128xf32>
      %219 = vector.extract_strided_slice %62 {offsets = [0, 5], sizes = [8, 1], strides = [1, 1]} : vector<8x17xf32> to vector<8x1xf32>
      %220 = vector.extract_strided_slice %64 {offsets = [5, 0], sizes = [1, 128], strides = [1, 1]} : vector<17x128xf32> to vector<1x128xf32>
      %221 = vector.broadcast %219 : vector<8x1xf32> to vector<8x128xf32>
      %222 = vector.broadcast %220 : vector<1x128xf32> to vector<8x128xf32>
      %223 = arith.subf %221, %222 : vector<8x128xf32>
      %224 = vector.extract_strided_slice %65 {offsets = [5, 0], sizes = [1, 128], strides = [1, 1]} : vector<17x128xf32> to vector<1x128xf32>
      %225 = arith.mulf %218, %218 : vector<8x128xf32>
      %226 = arith.mulf %223, %223 : vector<8x128xf32>
      %227 = arith.addf %225, %226 : vector<8x128xf32>
      %228 = vector.extract_strided_slice %66 {offsets = [5, 0], sizes = [1, 128], strides = [1, 1]} : vector<17x128xf32> to vector<1x128xf32>
      %229 = vector.broadcast %228 : vector<1x128xf32> to vector<8x128xf32>
      %230 = arith.mulf %227, %229 : vector<8x128xf32>
      %cst_44 = arith.constant 0.000000e+00 : f32
      %231 = vector.broadcast %cst_44 : f32 to vector<8x128xf32>
      %232 = arith.subf %231, %230 : vector<8x128xf32>
      %233 = math.exp %232 : vector<8x128xf32>
      %234 = vector.broadcast %224 : vector<1x128xf32> to vector<8x128xf32>
      %235 = arith.mulf %233, %234 : vector<8x128xf32>
      %236 = arith.addf %207, %235 : vector<8x128xf32>
      %237 = math.absf %218 : vector<8x128xf32>
      %238 = math.absf %223 : vector<8x128xf32>
      %239 = arith.addf %237, %238 : vector<8x128xf32>
      %240 = vector.broadcast %224 : vector<1x128xf32> to vector<8x128xf32>
      %241 = arith.mulf %239, %240 : vector<8x128xf32>
      %242 = arith.addf %213, %241 : vector<8x128xf32>
      %243 = vector.extract_strided_slice %61 {offsets = [0, 6], sizes = [8, 1], strides = [1, 1]} : vector<8x17xf32> to vector<8x1xf32>
      %244 = vector.extract_strided_slice %63 {offsets = [6, 0], sizes = [1, 128], strides = [1, 1]} : vector<17x128xf32> to vector<1x128xf32>
      %245 = vector.broadcast %243 : vector<8x1xf32> to vector<8x128xf32>
      %246 = vector.broadcast %244 : vector<1x128xf32> to vector<8x128xf32>
      %247 = arith.subf %245, %246 : vector<8x128xf32>
      %248 = vector.extract_strided_slice %62 {offsets = [0, 6], sizes = [8, 1], strides = [1, 1]} : vector<8x17xf32> to vector<8x1xf32>
      %249 = vector.extract_strided_slice %64 {offsets = [6, 0], sizes = [1, 128], strides = [1, 1]} : vector<17x128xf32> to vector<1x128xf32>
      %250 = vector.broadcast %248 : vector<8x1xf32> to vector<8x128xf32>
      %251 = vector.broadcast %249 : vector<1x128xf32> to vector<8x128xf32>
      %252 = arith.subf %250, %251 : vector<8x128xf32>
      %253 = vector.extract_strided_slice %65 {offsets = [6, 0], sizes = [1, 128], strides = [1, 1]} : vector<17x128xf32> to vector<1x128xf32>
      %254 = arith.mulf %247, %247 : vector<8x128xf32>
      %255 = arith.mulf %252, %252 : vector<8x128xf32>
      %256 = arith.addf %254, %255 : vector<8x128xf32>
      %257 = vector.extract_strided_slice %66 {offsets = [6, 0], sizes = [1, 128], strides = [1, 1]} : vector<17x128xf32> to vector<1x128xf32>
      %258 = vector.broadcast %257 : vector<1x128xf32> to vector<8x128xf32>
      %259 = arith.mulf %256, %258 : vector<8x128xf32>
      %cst_45 = arith.constant 0.000000e+00 : f32
      %260 = vector.broadcast %cst_45 : f32 to vector<8x128xf32>
      %261 = arith.subf %260, %259 : vector<8x128xf32>
      %262 = math.exp %261 : vector<8x128xf32>
      %263 = vector.broadcast %253 : vector<1x128xf32> to vector<8x128xf32>
      %264 = arith.mulf %262, %263 : vector<8x128xf32>
      %265 = arith.addf %236, %264 : vector<8x128xf32>
      %266 = math.absf %247 : vector<8x128xf32>
      %267 = math.absf %252 : vector<8x128xf32>
      %268 = arith.addf %266, %267 : vector<8x128xf32>
      %269 = vector.broadcast %253 : vector<1x128xf32> to vector<8x128xf32>
      %270 = arith.mulf %268, %269 : vector<8x128xf32>
      %271 = arith.addf %242, %270 : vector<8x128xf32>
      %272 = vector.extract_strided_slice %61 {offsets = [0, 7], sizes = [8, 1], strides = [1, 1]} : vector<8x17xf32> to vector<8x1xf32>
      %273 = vector.extract_strided_slice %63 {offsets = [7, 0], sizes = [1, 128], strides = [1, 1]} : vector<17x128xf32> to vector<1x128xf32>
      %274 = vector.broadcast %272 : vector<8x1xf32> to vector<8x128xf32>
      %275 = vector.broadcast %273 : vector<1x128xf32> to vector<8x128xf32>
      %276 = arith.subf %274, %275 : vector<8x128xf32>
      %277 = vector.extract_strided_slice %62 {offsets = [0, 7], sizes = [8, 1], strides = [1, 1]} : vector<8x17xf32> to vector<8x1xf32>
      %278 = vector.extract_strided_slice %64 {offsets = [7, 0], sizes = [1, 128], strides = [1, 1]} : vector<17x128xf32> to vector<1x128xf32>
      %279 = vector.broadcast %277 : vector<8x1xf32> to vector<8x128xf32>
      %280 = vector.broadcast %278 : vector<1x128xf32> to vector<8x128xf32>
      %281 = arith.subf %279, %280 : vector<8x128xf32>
      %282 = vector.extract_strided_slice %65 {offsets = [7, 0], sizes = [1, 128], strides = [1, 1]} : vector<17x128xf32> to vector<1x128xf32>
      %283 = arith.mulf %276, %276 : vector<8x128xf32>
      %284 = arith.mulf %281, %281 : vector<8x128xf32>
      %285 = arith.addf %283, %284 : vector<8x128xf32>
      %286 = vector.extract_strided_slice %66 {offsets = [7, 0], sizes = [1, 128], strides = [1, 1]} : vector<17x128xf32> to vector<1x128xf32>
      %287 = vector.broadcast %286 : vector<1x128xf32> to vector<8x128xf32>
      %288 = arith.mulf %285, %287 : vector<8x128xf32>
      %cst_46 = arith.constant 0.000000e+00 : f32
      %289 = vector.broadcast %cst_46 : f32 to vector<8x128xf32>
      %290 = arith.subf %289, %288 : vector<8x128xf32>
      %291 = math.exp %290 : vector<8x128xf32>
      %292 = vector.broadcast %282 : vector<1x128xf32> to vector<8x128xf32>
      %293 = arith.mulf %291, %292 : vector<8x128xf32>
      %294 = arith.addf %265, %293 : vector<8x128xf32>
      %295 = math.absf %276 : vector<8x128xf32>
      %296 = math.absf %281 : vector<8x128xf32>
      %297 = arith.addf %295, %296 : vector<8x128xf32>
      %298 = vector.broadcast %282 : vector<1x128xf32> to vector<8x128xf32>
      %299 = arith.mulf %297, %298 : vector<8x128xf32>
      %300 = arith.addf %271, %299 : vector<8x128xf32>
      %301 = vector.extract_strided_slice %61 {offsets = [0, 8], sizes = [8, 1], strides = [1, 1]} : vector<8x17xf32> to vector<8x1xf32>
      %302 = vector.extract_strided_slice %63 {offsets = [8, 0], sizes = [1, 128], strides = [1, 1]} : vector<17x128xf32> to vector<1x128xf32>
      %303 = vector.broadcast %301 : vector<8x1xf32> to vector<8x128xf32>
      %304 = vector.broadcast %302 : vector<1x128xf32> to vector<8x128xf32>
      %305 = arith.subf %303, %304 : vector<8x128xf32>
      %306 = vector.extract_strided_slice %62 {offsets = [0, 8], sizes = [8, 1], strides = [1, 1]} : vector<8x17xf32> to vector<8x1xf32>
      %307 = vector.extract_strided_slice %64 {offsets = [8, 0], sizes = [1, 128], strides = [1, 1]} : vector<17x128xf32> to vector<1x128xf32>
      %308 = vector.broadcast %306 : vector<8x1xf32> to vector<8x128xf32>
      %309 = vector.broadcast %307 : vector<1x128xf32> to vector<8x128xf32>
      %310 = arith.subf %308, %309 : vector<8x128xf32>
      %311 = vector.extract_strided_slice %65 {offsets = [8, 0], sizes = [1, 128], strides = [1, 1]} : vector<17x128xf32> to vector<1x128xf32>
      %312 = arith.mulf %305, %305 : vector<8x128xf32>
      %313 = arith.mulf %310, %310 : vector<8x128xf32>
      %314 = arith.addf %312, %313 : vector<8x128xf32>
      %315 = vector.extract_strided_slice %66 {offsets = [8, 0], sizes = [1, 128], strides = [1, 1]} : vector<17x128xf32> to vector<1x128xf32>
      %316 = vector.broadcast %315 : vector<1x128xf32> to vector<8x128xf32>
      %317 = arith.mulf %314, %316 : vector<8x128xf32>
      %cst_47 = arith.constant 0.000000e+00 : f32
      %318 = vector.broadcast %cst_47 : f32 to vector<8x128xf32>
      %319 = arith.subf %318, %317 : vector<8x128xf32>
      %320 = math.exp %319 : vector<8x128xf32>
      %321 = vector.broadcast %311 : vector<1x128xf32> to vector<8x128xf32>
      %322 = arith.mulf %320, %321 : vector<8x128xf32>
      %323 = arith.addf %294, %322 : vector<8x128xf32>
      %324 = math.absf %305 : vector<8x128xf32>
      %325 = math.absf %310 : vector<8x128xf32>
      %326 = arith.addf %324, %325 : vector<8x128xf32>
      %327 = vector.broadcast %311 : vector<1x128xf32> to vector<8x128xf32>
      %328 = arith.mulf %326, %327 : vector<8x128xf32>
      %329 = arith.addf %300, %328 : vector<8x128xf32>
      %330 = vector.extract_strided_slice %61 {offsets = [0, 9], sizes = [8, 1], strides = [1, 1]} : vector<8x17xf32> to vector<8x1xf32>
      %331 = vector.extract_strided_slice %63 {offsets = [9, 0], sizes = [1, 128], strides = [1, 1]} : vector<17x128xf32> to vector<1x128xf32>
      %332 = vector.broadcast %330 : vector<8x1xf32> to vector<8x128xf32>
      %333 = vector.broadcast %331 : vector<1x128xf32> to vector<8x128xf32>
      %334 = arith.subf %332, %333 : vector<8x128xf32>
      %335 = vector.extract_strided_slice %62 {offsets = [0, 9], sizes = [8, 1], strides = [1, 1]} : vector<8x17xf32> to vector<8x1xf32>
      %336 = vector.extract_strided_slice %64 {offsets = [9, 0], sizes = [1, 128], strides = [1, 1]} : vector<17x128xf32> to vector<1x128xf32>
      %337 = vector.broadcast %335 : vector<8x1xf32> to vector<8x128xf32>
      %338 = vector.broadcast %336 : vector<1x128xf32> to vector<8x128xf32>
      %339 = arith.subf %337, %338 : vector<8x128xf32>
      %340 = vector.extract_strided_slice %65 {offsets = [9, 0], sizes = [1, 128], strides = [1, 1]} : vector<17x128xf32> to vector<1x128xf32>
      %341 = arith.mulf %334, %334 : vector<8x128xf32>
      %342 = arith.mulf %339, %339 : vector<8x128xf32>
      %343 = arith.addf %341, %342 : vector<8x128xf32>
      %344 = vector.extract_strided_slice %66 {offsets = [9, 0], sizes = [1, 128], strides = [1, 1]} : vector<17x128xf32> to vector<1x128xf32>
      %345 = vector.broadcast %344 : vector<1x128xf32> to vector<8x128xf32>
      %346 = arith.mulf %343, %345 : vector<8x128xf32>
      %cst_48 = arith.constant 0.000000e+00 : f32
      %347 = vector.broadcast %cst_48 : f32 to vector<8x128xf32>
      %348 = arith.subf %347, %346 : vector<8x128xf32>
      %349 = math.exp %348 : vector<8x128xf32>
      %350 = vector.broadcast %340 : vector<1x128xf32> to vector<8x128xf32>
      %351 = arith.mulf %349, %350 : vector<8x128xf32>
      %352 = arith.addf %323, %351 : vector<8x128xf32>
      %353 = math.absf %334 : vector<8x128xf32>
      %354 = math.absf %339 : vector<8x128xf32>
      %355 = arith.addf %353, %354 : vector<8x128xf32>
      %356 = vector.broadcast %340 : vector<1x128xf32> to vector<8x128xf32>
      %357 = arith.mulf %355, %356 : vector<8x128xf32>
      %358 = arith.addf %329, %357 : vector<8x128xf32>
      %359 = vector.extract_strided_slice %61 {offsets = [0, 10], sizes = [8, 1], strides = [1, 1]} : vector<8x17xf32> to vector<8x1xf32>
      %360 = vector.extract_strided_slice %63 {offsets = [10, 0], sizes = [1, 128], strides = [1, 1]} : vector<17x128xf32> to vector<1x128xf32>
      %361 = vector.broadcast %359 : vector<8x1xf32> to vector<8x128xf32>
      %362 = vector.broadcast %360 : vector<1x128xf32> to vector<8x128xf32>
      %363 = arith.subf %361, %362 : vector<8x128xf32>
      %364 = vector.extract_strided_slice %62 {offsets = [0, 10], sizes = [8, 1], strides = [1, 1]} : vector<8x17xf32> to vector<8x1xf32>
      %365 = vector.extract_strided_slice %64 {offsets = [10, 0], sizes = [1, 128], strides = [1, 1]} : vector<17x128xf32> to vector<1x128xf32>
      %366 = vector.broadcast %364 : vector<8x1xf32> to vector<8x128xf32>
      %367 = vector.broadcast %365 : vector<1x128xf32> to vector<8x128xf32>
      %368 = arith.subf %366, %367 : vector<8x128xf32>
      %369 = vector.extract_strided_slice %65 {offsets = [10, 0], sizes = [1, 128], strides = [1, 1]} : vector<17x128xf32> to vector<1x128xf32>
      %370 = arith.mulf %363, %363 : vector<8x128xf32>
      %371 = arith.mulf %368, %368 : vector<8x128xf32>
      %372 = arith.addf %370, %371 : vector<8x128xf32>
      %373 = vector.extract_strided_slice %66 {offsets = [10, 0], sizes = [1, 128], strides = [1, 1]} : vector<17x128xf32> to vector<1x128xf32>
      %374 = vector.broadcast %373 : vector<1x128xf32> to vector<8x128xf32>
      %375 = arith.mulf %372, %374 : vector<8x128xf32>
      %cst_49 = arith.constant 0.000000e+00 : f32
      %376 = vector.broadcast %cst_49 : f32 to vector<8x128xf32>
      %377 = arith.subf %376, %375 : vector<8x128xf32>
      %378 = math.exp %377 : vector<8x128xf32>
      %379 = vector.broadcast %369 : vector<1x128xf32> to vector<8x128xf32>
      %380 = arith.mulf %378, %379 : vector<8x128xf32>
      %381 = arith.addf %352, %380 : vector<8x128xf32>
      %382 = math.absf %363 : vector<8x128xf32>
      %383 = math.absf %368 : vector<8x128xf32>
      %384 = arith.addf %382, %383 : vector<8x128xf32>
      %385 = vector.broadcast %369 : vector<1x128xf32> to vector<8x128xf32>
      %386 = arith.mulf %384, %385 : vector<8x128xf32>
      %387 = arith.addf %358, %386 : vector<8x128xf32>
      %388 = vector.extract_strided_slice %61 {offsets = [0, 11], sizes = [8, 1], strides = [1, 1]} : vector<8x17xf32> to vector<8x1xf32>
      %389 = vector.extract_strided_slice %63 {offsets = [11, 0], sizes = [1, 128], strides = [1, 1]} : vector<17x128xf32> to vector<1x128xf32>
      %390 = vector.broadcast %388 : vector<8x1xf32> to vector<8x128xf32>
      %391 = vector.broadcast %389 : vector<1x128xf32> to vector<8x128xf32>
      %392 = arith.subf %390, %391 : vector<8x128xf32>
      %393 = vector.extract_strided_slice %62 {offsets = [0, 11], sizes = [8, 1], strides = [1, 1]} : vector<8x17xf32> to vector<8x1xf32>
      %394 = vector.extract_strided_slice %64 {offsets = [11, 0], sizes = [1, 128], strides = [1, 1]} : vector<17x128xf32> to vector<1x128xf32>
      %395 = vector.broadcast %393 : vector<8x1xf32> to vector<8x128xf32>
      %396 = vector.broadcast %394 : vector<1x128xf32> to vector<8x128xf32>
      %397 = arith.subf %395, %396 : vector<8x128xf32>
      %398 = vector.extract_strided_slice %65 {offsets = [11, 0], sizes = [1, 128], strides = [1, 1]} : vector<17x128xf32> to vector<1x128xf32>
      %399 = arith.mulf %392, %392 : vector<8x128xf32>
      %400 = arith.mulf %397, %397 : vector<8x128xf32>
      %401 = arith.addf %399, %400 : vector<8x128xf32>
      %402 = vector.extract_strided_slice %66 {offsets = [11, 0], sizes = [1, 128], strides = [1, 1]} : vector<17x128xf32> to vector<1x128xf32>
      %403 = vector.broadcast %402 : vector<1x128xf32> to vector<8x128xf32>
      %404 = arith.mulf %401, %403 : vector<8x128xf32>
      %cst_50 = arith.constant 0.000000e+00 : f32
      %405 = vector.broadcast %cst_50 : f32 to vector<8x128xf32>
      %406 = arith.subf %405, %404 : vector<8x128xf32>
      %407 = math.exp %406 : vector<8x128xf32>
      %408 = vector.broadcast %398 : vector<1x128xf32> to vector<8x128xf32>
      %409 = arith.mulf %407, %408 : vector<8x128xf32>
      %410 = arith.addf %381, %409 : vector<8x128xf32>
      %411 = math.absf %392 : vector<8x128xf32>
      %412 = math.absf %397 : vector<8x128xf32>
      %413 = arith.addf %411, %412 : vector<8x128xf32>
      %414 = vector.broadcast %398 : vector<1x128xf32> to vector<8x128xf32>
      %415 = arith.mulf %413, %414 : vector<8x128xf32>
      %416 = arith.addf %387, %415 : vector<8x128xf32>
      %417 = vector.extract_strided_slice %61 {offsets = [0, 12], sizes = [8, 1], strides = [1, 1]} : vector<8x17xf32> to vector<8x1xf32>
      %418 = vector.extract_strided_slice %63 {offsets = [12, 0], sizes = [1, 128], strides = [1, 1]} : vector<17x128xf32> to vector<1x128xf32>
      %419 = vector.broadcast %417 : vector<8x1xf32> to vector<8x128xf32>
      %420 = vector.broadcast %418 : vector<1x128xf32> to vector<8x128xf32>
      %421 = arith.subf %419, %420 : vector<8x128xf32>
      %422 = vector.extract_strided_slice %62 {offsets = [0, 12], sizes = [8, 1], strides = [1, 1]} : vector<8x17xf32> to vector<8x1xf32>
      %423 = vector.extract_strided_slice %64 {offsets = [12, 0], sizes = [1, 128], strides = [1, 1]} : vector<17x128xf32> to vector<1x128xf32>
      %424 = vector.broadcast %422 : vector<8x1xf32> to vector<8x128xf32>
      %425 = vector.broadcast %423 : vector<1x128xf32> to vector<8x128xf32>
      %426 = arith.subf %424, %425 : vector<8x128xf32>
      %427 = vector.extract_strided_slice %65 {offsets = [12, 0], sizes = [1, 128], strides = [1, 1]} : vector<17x128xf32> to vector<1x128xf32>
      %428 = arith.mulf %421, %421 : vector<8x128xf32>
      %429 = arith.mulf %426, %426 : vector<8x128xf32>
      %430 = arith.addf %428, %429 : vector<8x128xf32>
      %431 = vector.extract_strided_slice %66 {offsets = [12, 0], sizes = [1, 128], strides = [1, 1]} : vector<17x128xf32> to vector<1x128xf32>
      %432 = vector.broadcast %431 : vector<1x128xf32> to vector<8x128xf32>
      %433 = arith.mulf %430, %432 : vector<8x128xf32>
      %cst_51 = arith.constant 0.000000e+00 : f32
      %434 = vector.broadcast %cst_51 : f32 to vector<8x128xf32>
      %435 = arith.subf %434, %433 : vector<8x128xf32>
      %436 = math.exp %435 : vector<8x128xf32>
      %437 = vector.broadcast %427 : vector<1x128xf32> to vector<8x128xf32>
      %438 = arith.mulf %436, %437 : vector<8x128xf32>
      %439 = arith.addf %410, %438 : vector<8x128xf32>
      %440 = math.absf %421 : vector<8x128xf32>
      %441 = math.absf %426 : vector<8x128xf32>
      %442 = arith.addf %440, %441 : vector<8x128xf32>
      %443 = vector.broadcast %427 : vector<1x128xf32> to vector<8x128xf32>
      %444 = arith.mulf %442, %443 : vector<8x128xf32>
      %445 = arith.addf %416, %444 : vector<8x128xf32>
      %446 = vector.extract_strided_slice %61 {offsets = [0, 13], sizes = [8, 1], strides = [1, 1]} : vector<8x17xf32> to vector<8x1xf32>
      %447 = vector.extract_strided_slice %63 {offsets = [13, 0], sizes = [1, 128], strides = [1, 1]} : vector<17x128xf32> to vector<1x128xf32>
      %448 = vector.broadcast %446 : vector<8x1xf32> to vector<8x128xf32>
      %449 = vector.broadcast %447 : vector<1x128xf32> to vector<8x128xf32>
      %450 = arith.subf %448, %449 : vector<8x128xf32>
      %451 = vector.extract_strided_slice %62 {offsets = [0, 13], sizes = [8, 1], strides = [1, 1]} : vector<8x17xf32> to vector<8x1xf32>
      %452 = vector.extract_strided_slice %64 {offsets = [13, 0], sizes = [1, 128], strides = [1, 1]} : vector<17x128xf32> to vector<1x128xf32>
      %453 = vector.broadcast %451 : vector<8x1xf32> to vector<8x128xf32>
      %454 = vector.broadcast %452 : vector<1x128xf32> to vector<8x128xf32>
      %455 = arith.subf %453, %454 : vector<8x128xf32>
      %456 = vector.extract_strided_slice %65 {offsets = [13, 0], sizes = [1, 128], strides = [1, 1]} : vector<17x128xf32> to vector<1x128xf32>
      %457 = arith.mulf %450, %450 : vector<8x128xf32>
      %458 = arith.mulf %455, %455 : vector<8x128xf32>
      %459 = arith.addf %457, %458 : vector<8x128xf32>
      %460 = vector.extract_strided_slice %66 {offsets = [13, 0], sizes = [1, 128], strides = [1, 1]} : vector<17x128xf32> to vector<1x128xf32>
      %461 = vector.broadcast %460 : vector<1x128xf32> to vector<8x128xf32>
      %462 = arith.mulf %459, %461 : vector<8x128xf32>
      %cst_52 = arith.constant 0.000000e+00 : f32
      %463 = vector.broadcast %cst_52 : f32 to vector<8x128xf32>
      %464 = arith.subf %463, %462 : vector<8x128xf32>
      %465 = math.exp %464 : vector<8x128xf32>
      %466 = vector.broadcast %456 : vector<1x128xf32> to vector<8x128xf32>
      %467 = arith.mulf %465, %466 : vector<8x128xf32>
      %468 = arith.addf %439, %467 : vector<8x128xf32>
      %469 = math.absf %450 : vector<8x128xf32>
      %470 = math.absf %455 : vector<8x128xf32>
      %471 = arith.addf %469, %470 : vector<8x128xf32>
      %472 = vector.broadcast %456 : vector<1x128xf32> to vector<8x128xf32>
      %473 = arith.mulf %471, %472 : vector<8x128xf32>
      %474 = arith.addf %445, %473 : vector<8x128xf32>
      %475 = vector.extract_strided_slice %61 {offsets = [0, 14], sizes = [8, 1], strides = [1, 1]} : vector<8x17xf32> to vector<8x1xf32>
      %476 = vector.extract_strided_slice %63 {offsets = [14, 0], sizes = [1, 128], strides = [1, 1]} : vector<17x128xf32> to vector<1x128xf32>
      %477 = vector.broadcast %475 : vector<8x1xf32> to vector<8x128xf32>
      %478 = vector.broadcast %476 : vector<1x128xf32> to vector<8x128xf32>
      %479 = arith.subf %477, %478 : vector<8x128xf32>
      %480 = vector.extract_strided_slice %62 {offsets = [0, 14], sizes = [8, 1], strides = [1, 1]} : vector<8x17xf32> to vector<8x1xf32>
      %481 = vector.extract_strided_slice %64 {offsets = [14, 0], sizes = [1, 128], strides = [1, 1]} : vector<17x128xf32> to vector<1x128xf32>
      %482 = vector.broadcast %480 : vector<8x1xf32> to vector<8x128xf32>
      %483 = vector.broadcast %481 : vector<1x128xf32> to vector<8x128xf32>
      %484 = arith.subf %482, %483 : vector<8x128xf32>
      %485 = vector.extract_strided_slice %65 {offsets = [14, 0], sizes = [1, 128], strides = [1, 1]} : vector<17x128xf32> to vector<1x128xf32>
      %486 = arith.mulf %479, %479 : vector<8x128xf32>
      %487 = arith.mulf %484, %484 : vector<8x128xf32>
      %488 = arith.addf %486, %487 : vector<8x128xf32>
      %489 = vector.extract_strided_slice %66 {offsets = [14, 0], sizes = [1, 128], strides = [1, 1]} : vector<17x128xf32> to vector<1x128xf32>
      %490 = vector.broadcast %489 : vector<1x128xf32> to vector<8x128xf32>
      %491 = arith.mulf %488, %490 : vector<8x128xf32>
      %cst_53 = arith.constant 0.000000e+00 : f32
      %492 = vector.broadcast %cst_53 : f32 to vector<8x128xf32>
      %493 = arith.subf %492, %491 : vector<8x128xf32>
      %494 = math.exp %493 : vector<8x128xf32>
      %495 = vector.broadcast %485 : vector<1x128xf32> to vector<8x128xf32>
      %496 = arith.mulf %494, %495 : vector<8x128xf32>
      %497 = arith.addf %468, %496 : vector<8x128xf32>
      %498 = math.absf %479 : vector<8x128xf32>
      %499 = math.absf %484 : vector<8x128xf32>
      %500 = arith.addf %498, %499 : vector<8x128xf32>
      %501 = vector.broadcast %485 : vector<1x128xf32> to vector<8x128xf32>
      %502 = arith.mulf %500, %501 : vector<8x128xf32>
      %503 = arith.addf %474, %502 : vector<8x128xf32>
      %504 = vector.extract_strided_slice %61 {offsets = [0, 15], sizes = [8, 1], strides = [1, 1]} : vector<8x17xf32> to vector<8x1xf32>
      %505 = vector.extract_strided_slice %63 {offsets = [15, 0], sizes = [1, 128], strides = [1, 1]} : vector<17x128xf32> to vector<1x128xf32>
      %506 = vector.broadcast %504 : vector<8x1xf32> to vector<8x128xf32>
      %507 = vector.broadcast %505 : vector<1x128xf32> to vector<8x128xf32>
      %508 = arith.subf %506, %507 : vector<8x128xf32>
      %509 = vector.extract_strided_slice %62 {offsets = [0, 15], sizes = [8, 1], strides = [1, 1]} : vector<8x17xf32> to vector<8x1xf32>
      %510 = vector.extract_strided_slice %64 {offsets = [15, 0], sizes = [1, 128], strides = [1, 1]} : vector<17x128xf32> to vector<1x128xf32>
      %511 = vector.broadcast %509 : vector<8x1xf32> to vector<8x128xf32>
      %512 = vector.broadcast %510 : vector<1x128xf32> to vector<8x128xf32>
      %513 = arith.subf %511, %512 : vector<8x128xf32>
      %514 = vector.extract_strided_slice %65 {offsets = [15, 0], sizes = [1, 128], strides = [1, 1]} : vector<17x128xf32> to vector<1x128xf32>
      %515 = arith.mulf %508, %508 : vector<8x128xf32>
      %516 = arith.mulf %513, %513 : vector<8x128xf32>
      %517 = arith.addf %515, %516 : vector<8x128xf32>
      %518 = vector.extract_strided_slice %66 {offsets = [15, 0], sizes = [1, 128], strides = [1, 1]} : vector<17x128xf32> to vector<1x128xf32>
      %519 = vector.broadcast %518 : vector<1x128xf32> to vector<8x128xf32>
      %520 = arith.mulf %517, %519 : vector<8x128xf32>
      %cst_54 = arith.constant 0.000000e+00 : f32
      %521 = vector.broadcast %cst_54 : f32 to vector<8x128xf32>
      %522 = arith.subf %521, %520 : vector<8x128xf32>
      %523 = math.exp %522 : vector<8x128xf32>
      %524 = vector.broadcast %514 : vector<1x128xf32> to vector<8x128xf32>
      %525 = arith.mulf %523, %524 : vector<8x128xf32>
      %526 = arith.addf %497, %525 : vector<8x128xf32>
      %527 = math.absf %508 : vector<8x128xf32>
      %528 = math.absf %513 : vector<8x128xf32>
      %529 = arith.addf %527, %528 : vector<8x128xf32>
      %530 = vector.broadcast %514 : vector<1x128xf32> to vector<8x128xf32>
      %531 = arith.mulf %529, %530 : vector<8x128xf32>
      %532 = arith.addf %503, %531 : vector<8x128xf32>
      %533 = vector.extract_strided_slice %61 {offsets = [0, 16], sizes = [8, 1], strides = [1, 1]} : vector<8x17xf32> to vector<8x1xf32>
      %534 = vector.extract_strided_slice %63 {offsets = [16, 0], sizes = [1, 128], strides = [1, 1]} : vector<17x128xf32> to vector<1x128xf32>
      %535 = vector.broadcast %533 : vector<8x1xf32> to vector<8x128xf32>
      %536 = vector.broadcast %534 : vector<1x128xf32> to vector<8x128xf32>
      %537 = arith.subf %535, %536 : vector<8x128xf32>
      %538 = vector.extract_strided_slice %62 {offsets = [0, 16], sizes = [8, 1], strides = [1, 1]} : vector<8x17xf32> to vector<8x1xf32>
      %539 = vector.extract_strided_slice %64 {offsets = [16, 0], sizes = [1, 128], strides = [1, 1]} : vector<17x128xf32> to vector<1x128xf32>
      %540 = vector.broadcast %538 : vector<8x1xf32> to vector<8x128xf32>
      %541 = vector.broadcast %539 : vector<1x128xf32> to vector<8x128xf32>
      %542 = arith.subf %540, %541 : vector<8x128xf32>
      %543 = vector.extract_strided_slice %65 {offsets = [16, 0], sizes = [1, 128], strides = [1, 1]} : vector<17x128xf32> to vector<1x128xf32>
      %544 = arith.mulf %537, %537 : vector<8x128xf32>
      %545 = arith.mulf %542, %542 : vector<8x128xf32>
      %546 = arith.addf %544, %545 : vector<8x128xf32>
      %547 = vector.extract_strided_slice %66 {offsets = [16, 0], sizes = [1, 128], strides = [1, 1]} : vector<17x128xf32> to vector<1x128xf32>
      %548 = vector.broadcast %547 : vector<1x128xf32> to vector<8x128xf32>
      %549 = arith.mulf %546, %548 : vector<8x128xf32>
      %cst_55 = arith.constant 0.000000e+00 : f32
      %550 = vector.broadcast %cst_55 : f32 to vector<8x128xf32>
      %551 = arith.subf %550, %549 : vector<8x128xf32>
      %552 = math.exp %551 : vector<8x128xf32>
      %553 = vector.broadcast %543 : vector<1x128xf32> to vector<8x128xf32>
      %554 = arith.mulf %552, %553 : vector<8x128xf32>
      %555 = arith.addf %526, %554 : vector<8x128xf32>
      %556 = math.absf %537 : vector<8x128xf32>
      %557 = math.absf %542 : vector<8x128xf32>
      %558 = arith.addf %556, %557 : vector<8x128xf32>
      %559 = vector.broadcast %543 : vector<1x128xf32> to vector<8x128xf32>
      %560 = arith.mulf %558, %559 : vector<8x128xf32>
      %561 = arith.addf %532, %560 : vector<8x128xf32>
      %c0_56 = arith.constant 0 : index
      %c0_57 = arith.constant 0 : index
      %562 = vector.load %arg12[%c0_56, %c0_57] : memref<1x128xf32, #tpu.memory_space<vmem>>, vector<1x128xf32>
      %563 = vector.broadcast %562 : vector<1x128xf32> to vector<8x128xf32>
      %564 = arith.mulf %555, %563 : vector<8x128xf32>
      %cst_58 = arith.constant 9.99999997E-7 : f32
      %565 = vector.broadcast %cst_58 : f32 to vector<8x128xf32>
      %566 = arith.maximumf %564, %565 : vector<8x128xf32>
      %cst_59 = arith.constant 1.000000e+00 : f32
      %567 = vector.broadcast %cst_59 : f32 to vector<8x128xf32>
      %568 = arith.subf %567, %566 : vector<8x128xf32>
      %c0_60 = arith.constant 0 : index
      %c0_61 = arith.constant 0 : index
      %569 = vector.load %arg13[%c0_60, %c0_61] : memref<8x128xf32, #tpu.memory_space<vmem>>, vector<8x128xf32>
      %cst_62 = arith.constant 1.000000e+00 : f32
      %570 = vector.broadcast %cst_62 : f32 to vector<8x128xf32>
      %571 = arith.mulf %570, %561 : vector<8x128xf32>
      %cst_63 = arith.constant 0.00999999977 : f32
      %572 = vector.broadcast %cst_63 : f32 to vector<8x128xf32>
      %573 = arith.mulf %572, %568 : vector<8x128xf32>
      %574 = arith.addf %571, %573 : vector<8x128xf32>
      %575 = arith.addf %569, %574 : vector<8x128xf32>
      %c0_64 = arith.constant 0 : index
      %c0_65 = arith.constant 0 : index
      %576 = vector.load %arg13[%c0_64, %c0_65] : memref<8x128xf32, #tpu.memory_space<vmem>>, vector<8x128xf32>
      tpu.vector_store %arg13[%c0_64, %c0_65], %575 {strides = array<i32>} : memref<8x128xf32, #tpu.memory_space<vmem>>, vector<8x128xf32>,
      %cst_66 = arith.constant 0.000000e+00 : f32
      %577 = vector.broadcast %cst_66 : f32 to vector<8x128xf32>
      %578 = arith.select %11, %561, %577 : vector<8x128xi1>, vector<8x128xf32>
      %cst_67 = arith.constant dense<0.000000e+00> : vector<128xf32>
      %579 = vector.multi_reduction <add>, %578, %cst_67 [0] : vector<8x128xf32> to vector<128xf32>
      %580 = vector.shape_cast %579 : vector<128xf32> to vector<1x128xf32>
      %c0_68 = arith.constant 0 : index
      %c3 = arith.constant 3 : index
      %c0_69 = arith.constant 0 : index
      %581 = vector.load %arg14[%c0_68, %c3, %c0_69] : memref<1x4x128xf32, #tpu.memory_space<vmem>>, vector<1x1x128xf32>
      %582 = vector.shape_cast %581 : vector<1x1x128xf32> to vector<1x128xf32>
      %583 = vector.shape_cast %580 : vector<1x128xf32> to vector<1x1x128xf32>
      tpu.vector_store %arg14[%c0_68, %c3, %c0_69], %583 {strides = array<i32>} : memref<1x4x128xf32, #tpu.memory_space<vmem>>, vector<1x1x128xf32>,
    } else {
    }
    return
  }
  func.func @transform_0(%arg0: i32, %arg1: memref<1xi32, #tpu.memory_space<smem>>) -> (i32, i32) {
    %c0_i32 = arith.constant 0 : i32
    %c0_i32_0 = arith.constant 0 : i32
    return %arg0, %c0_i32 : i32, i32
  }
  func.func @transform_1(%arg0: i32, %arg1: memref<1xi32, #tpu.memory_space<smem>>) -> (i32, i32) {
    %c0_i32 = arith.constant 0 : i32
    %c0_i32_0 = arith.constant 0 : i32
    %c0_i32_1 = arith.constant 0 : i32
    return %c0_i32, %c0_i32_0 : i32, i32
  }
  func.func @transform_2(%arg0: i32, %arg1: memref<1xi32, #tpu.memory_space<smem>>) -> (i32, i32) {
    %c0_i32 = arith.constant 0 : i32
    %c0_i32_0 = arith.constant 0 : i32
    return %arg0, %c0_i32 : i32, i32
  }
  func.func @transform_3(%arg0: i32, %arg1: memref<1xi32, #tpu.memory_space<smem>>) -> (i32, i32) {
    %c0_i32 = arith.constant 0 : i32
    %c0_i32_0 = arith.constant 0 : i32
    %c0_i32_1 = arith.constant 0 : i32
    return %c0_i32, %c0_i32_0 : i32, i32
  }
  func.func @transform_4(%arg0: i32, %arg1: memref<1xi32, #tpu.memory_space<smem>>) -> (i32, i32) {
    %c0_i32 = arith.constant 0 : i32
    %c0_i32_0 = arith.constant 0 : i32
    return %arg0, %c0_i32 : i32, i32
  }
  func.func @transform_5(%arg0: i32, %arg1: memref<1xi32, #tpu.memory_space<smem>>) -> (i32, i32) {
    %c0_i32 = arith.constant 0 : i32
    %c0_i32_0 = arith.constant 0 : i32
    return %arg0, %c0_i32 : i32, i32
  }
  func.func @transform_6(%arg0: i32, %arg1: memref<1xi32, #tpu.memory_space<smem>>) -> (i32, i32) {
    %c0_i32 = arith.constant 0 : i32
    %c0_i32_0 = arith.constant 0 : i32
    %c0_i32_1 = arith.constant 0 : i32
    return %c0_i32, %c0_i32_0 : i32, i32
  }
  func.func @transform_7(%arg0: i32, %arg1: memref<1xi32, #tpu.memory_space<smem>>) -> (i32, i32) {
    %c0_i32 = arith.constant 0 : i32
    %c0_i32_0 = arith.constant 0 : i32
    %c0_i32_1 = arith.constant 0 : i32
    return %c0_i32, %c0_i32_0 : i32, i32
  }
  func.func @transform_8(%arg0: i32, %arg1: memref<1xi32, #tpu.memory_space<smem>>) -> (i32, i32) {
    %c0_i32 = arith.constant 0 : i32
    %c0_i32_0 = arith.constant 0 : i32
    %c0_i32_1 = arith.constant 0 : i32
    return %c0_i32, %c0_i32_0 : i32, i32
  }
  func.func @transform_9(%arg0: i32, %arg1: memref<1xi32, #tpu.memory_space<smem>>) -> (i32, i32) {
    %c0_i32 = arith.constant 0 : i32
    %c0_i32_0 = arith.constant 0 : i32
    %c0_i32_1 = arith.constant 0 : i32
    return %c0_i32, %c0_i32_0 : i32, i32
  }
  func.func @transform_10(%arg0: i32, %arg1: memref<1xi32, #tpu.memory_space<smem>>) -> (i32, i32) {
    %c0_i32 = arith.constant 0 : i32
    %c0_i32_0 = arith.constant 0 : i32
    %c0_i32_1 = arith.constant 0 : i32
    return %c0_i32, %c0_i32_0 : i32, i32
  }
  func.func @transform_11(%arg0: i32, %arg1: memref<1xi32, #tpu.memory_space<smem>>) -> (i32, i32) {
    %c0_i32 = arith.constant 0 : i32
    %c0_i32_0 = arith.constant 0 : i32
    return %arg0, %c0_i32 : i32, i32
  }
  func.func @transform_12(%arg0: i32, %arg1: memref<1xi32, #tpu.memory_space<smem>>) -> (i32, i32, i32) {
    %c0_i32 = arith.constant 0 : i32
    %c0_i32_0 = arith.constant 0 : i32
    %c0_i32_1 = arith.constant 0 : i32
    return %arg0, %c0_i32, %c0_i32_0 : i32, i32, i32
  }
}

</mosaic_0001>

<llo_original>
// kernel: tpu_custom_call.1
$region0: #{tpu_custom_call.1}
  #allocation0 [shape = 'u32[]', space=smem, size = 0x4, offset = 0x4, fixed_abs, tag = 'smem constant byte address 0x4 - core index']
  #allocation1 [shape = 'u32[144,128]{1,0:T(1,128)}', space=vmem, size = 0x12000, scoped, tag = 'internal scratch']
  #allocation2 [shape = 's32[1]{0}', space=sflag, size = 0x4, scoped, tag = 'scoped memory for tpu_custom_call.1']
  #allocation3 [shape = 's32[1]{0:T(128)S(6)}', space=smem, size = 0x200, scoped, tag = 'prefetched SMEM operand 0']
  %s0 = inlined_call_operand.<no memory space> [shape: s32[1], index: 0, kind: input, shape index: {}]
  %s1 = inlined_call_operand.vmem [shape: f32[16,8], index: 1, kind: input, shape index: {}]
  %s2 = inlined_call_operand.hbm [shape: f32[8,128], index: 2, kind: input, shape index: {}]
  %s3 = inlined_call_operand.vmem [shape: f32[16,4], index: 3, kind: input, shape index: {}]
  %s4 = inlined_call_operand.hbm [shape: f32[4,128], index: 4, kind: input, shape index: {}]
  %s5 = inlined_call_operand.hbm [shape: f32[16,17], index: 5, kind: input, shape index: {}]
  %s6 = inlined_call_operand.hbm [shape: f32[16,17], index: 6, kind: input, shape index: {}]
  %s7 = inlined_call_operand.vmem [shape: f32[17,128], index: 7, kind: input, shape index: {}]
  %s8 = inlined_call_operand.vmem [shape: f32[17,128], index: 8, kind: input, shape index: {}]
  %s9 = inlined_call_operand.hbm [shape: f32[17,128], index: 9, kind: input, shape index: {}]
  %s10 = inlined_call_operand.hbm [shape: f32[17,128], index: 10, kind: input, shape index: {}]
  %s11 = inlined_call_operand.vmem [shape: f32[1,128], index: 11, kind: input, shape index: {}]
  %s12 = inlined_call_operand.hbm [shape: f32[16,128], index: 12, kind: output, shape index: {0}]
  %s13 = inlined_call_operand.hbm [shape: f32[2,4,128], index: 13, kind: output, shape index: {1}]
  %14 = xla_tuple %s12, %s13
  %s15 = sld [smem:[#allocation0]]
  $region117: #{tpu_custom_call.1} parent=0
    _
  %s17 = ssub.s32 1, %s15
  %s18 = scalar_select 0, %s17, %s15
  %19 = sst [smem:[#allocation3]] %s0
  $region1: #{tpu_custom_call.1} parent=0
    #allocation4 [shape = 'u8[4096]{0}', space=vmem, size = 0x1000, scoped, tag = 'input window, operand 2, single buffered']
    #allocation5 [shape = 's32[2]{0}', space=sflag, size = 0x8, scoped, tag = 'scoped memory for tpu_custom_call.1']
    #allocation6 [shape = 's32[2]{0}', space=sflag, size = 0x8, scoped, tag = 'scoped memory for tpu_custom_call.1']
    #allocation7 [shape = 'u8[2048]{0}', space=vmem, size = 0x800, scoped, tag = 'input window, operand 4, single buffered']
    #allocation8 [shape = 's32[1]{0}', space=sflag, size = 0x4, scoped, tag = 'scoped memory for tpu_custom_call.1']
    #allocation9 [shape = 'u8[8192]{0}', space=vmem, size = 0x2000, scoped, tag = 'input window, operand 5']
    #allocation10 [shape = 'u8[8192]{0}', space=vmem, size = 0x2000, scoped, tag = 'input window, operand 6']
    #allocation11 [shape = 'u8[12288]{0}', space=vmem, size = 0x3000, scoped, tag = 'input window, operand 9, single buffered']
    #allocation12 [shape = 'u8[12288]{0}', space=vmem, size = 0x3000, scoped, tag = 'input window, operand 10, single buffered']
    #allocation13 [shape = 's32[1]{0}', space=sflag, size = 0x4, scoped, tag = 'scoped memory for tpu_custom_call.1']
    #allocation14 [shape = 'u8[8192]{0}', space=vmem, size = 0x2000, scoped, tag = 'output window, operand 0']
    #allocation15 [shape = 'u8[4096]{0}', space=vmem, size = 0x1000, scoped, tag = 'output window, operand 1']
    #allocation16 [shape = 's32[2]{0}', space=sflag, size = 0x8, scoped, tag = 'scoped memory for tpu_custom_call.1']
    %20 = vsyncpa [#allocation5], 0
    %21 = vsyncpa [#allocation8], 0
    %22 = vsyncpa [#allocation13], 0
    %23 = vsyncpa [#allocation6], 0
    %s24 = scalar_lea.sflag [#allocation6], 1
    %25 = vsyncpa %s24, 0
    %26 = vsyncpa [#allocation16], 0
    %s27 = scalar_lea.sflag [#allocation16], 1
    %28 = vsyncpa %s27, 0
    loop: start=0, step=1, limit=4
    $region2: #{tpu_custom_call.1} parent=1 // loop_pre_header
      _
    $region3: #{tpu_custom_call.1} parent=1 // loop_header
      %s30 = sphi 0, %s34
      %p31 = scmp.ge.s32.totalorder %s30, 4
      %s40 = sphi 0, %s42
      %s43 = sphi 0, %s40
      %s44 = sphi 0, %s43
      %s60 = sphi 0, %s44
      %s64 = sphi 0, %s64
      %s66 = sphi 0, %s64
      %s67 = sphi 0, %s66
      %s81 = sphi 0, %s67
      %s87 = sphi 0, %s89
      %s90 = sphi 0, %s87
      %s91 = sphi 0, %s90
      %s107 = sphi 0, %s91
      %s111 = sphi 0, %s111
      %s113 = sphi 0, %s111
      %s114 = sphi 0, %s113
      %s128 = sphi 0, %s114
      %s134 = sphi 0, %s136
      %s137 = sphi 0, %s134
      %s138 = sphi 0, %s137
      %s154 = sphi 0, %s138
      %s160 = sphi 0, %s162
      %s163 = sphi 0, %s160
      %s164 = sphi 0, %s163
      %s180 = sphi 0, %s164
      %s184 = sphi 0, %s184
      %s186 = sphi 0, %s184
      %s187 = sphi 0, %s186
      %s201 = sphi 0, %s187
      %s205 = sphi 0, %s205
      %s207 = sphi 0, %s205
      %s208 = sphi 0, %s207
      %s222 = sphi 0, %s208
      %s226 = sphi 0, %s226
      %s228 = sphi 0, %s226
      %s229 = sphi 0, %s228
      %s243 = sphi 0, %s229
      %s247 = sphi 0, %s247
      %s249 = sphi 0, %s247
      %s250 = sphi 0, %s249
      %s264 = sphi 0, %s250
      %s268 = sphi 0, %s268
      %s270 = sphi 0, %s268
      %s271 = sphi 0, %s270
      %s285 = sphi 0, %s271
      %s291 = sphi 0, %s293
      %s294 = sphi 0, %s291
      %s295 = sphi 0, %s294
      %s311 = sphi 0, %s295
      %s317 = sphi 0, %s319
      %s320 = sphi 0, %s317
      %s321 = sphi 0, %s320
      %s337 = sphi 0, %s321
    $region4: #{tpu_custom_call.1} parent=1 // loop_header_branch
      %33 = sbr.rel (%p31) target = $region8
    $region5: #{tpu_custom_call.1} parent=1 // loop_body
      %s35 = ssub.s32 %s30, 1
      %s36 = ssub.s32 %s30, 2
      %s37 = sadd.s32 %s30, 1
      %s38 = ssub.s32 %s30, %s37
      %p39 = scmp.eq.s32.totalorder %s38, 0
      %s41 = sadd.s32 %s40, 1
      %s42 = scalar_select %p39, %s40, %s41
      %p45 = pneg %p39
      %p46 = scmp.eq.s32.totalorder %s30, 1
      %p47 = por %p45, %p46
      %p48 = scmp.ne.s32.totalorder %s40, %s43
      %p49 = scmp.eq.s32.totalorder %s30, 0
      %p50 = por %p48, %p49
      %p51 = scmp.ne.s32.totalorder %s40, %s43
      %p52 = scmp.eq.s32.totalorder %s35, 1
      %p53 = por %p51, %p52
      %p54 = scmp.ne.s32.totalorder %s43, %s44
      %p55 = scmp.eq.s32.totalorder %s35, 0
      %p56 = por %p54, %p55
      %p57 = scmp.ne.s32.totalorder %s43, %s44
      %p58 = scmp.eq.s32.totalorder %s36, 1
      %p59 = por %p57, %p58
      %p61 = scmp.ne.s32.totalorder %s44, %s60
      %p62 = scmp.eq.s32.totalorder %s36, 0
      %p63 = por %p61, %p62
      %s65 = sadd.s32 %s64, 1
      %p68 = scmp.eq.s32.totalorder %s30, 1
      %p69 = scmp.ne.s32.totalorder %s64, %s66
      %p70 = scmp.eq.s32.totalorder %s30, 0
      %p71 = por %p69, %p70
      %p72 = scmp.ne.s32.totalorder %s64, %s66
      %p73 = scmp.eq.s32.totalorder %s35, 1
      %p74 = por %p72, %p73
      %p75 = scmp.ne.s32.totalorder %s66, %s67
      %p76 = scmp.eq.s32.totalorder %s35, 0
      %p77 = por %p75, %p76
      %p78 = scmp.ne.s32.totalorder %s66, %s67
      %p79 = scmp.eq.s32.totalorder %s36, 1
      %p80 = por %p78, %p79
      %p82 = scmp.ne.s32.totalorder %s67, %s81
      %p83 = scmp.eq.s32.totalorder %s36, 0
      %p84 = por %p82, %p83
      %s85 = ssub.s32 %s30, %s37
      %p86 = scmp.eq.s32.totalorder %s85, 0
      %s88 = sadd.s32 %s87, 1
      %s89 = scalar_select %p86, %s87, %s88
      %p92 = pneg %p86
      %p93 = scmp.eq.s32.totalorder %s30, 1
      %p94 = por %p92, %p93
      %p95 = scmp.ne.s32.totalorder %s87, %s90
      %p96 = scmp.eq.s32.totalorder %s30, 0
      %p97 = por %p95, %p96
      %p98 = scmp.ne.s32.totalorder %s87, %s90
      %p99 = scmp.eq.s32.totalorder %s35, 1
      %p100 = por %p98, %p99
      %p101 = scmp.ne.s32.totalorder %s90, %s91
      %p102 = scmp.eq.s32.totalorder %s35, 0
      %p103 = por %p101, %p102
      %p104 = scmp.ne.s32.totalorder %s90, %s91
      %p105 = scmp.eq.s32.totalorder %s36, 1
      %p106 = por %p104, %p105
      %p108 = scmp.ne.s32.totalorder %s91, %s107
      %p109 = scmp.eq.s32.totalorder %s36, 0
      %p110 = por %p108, %p109
      %s112 = sadd.s32 %s111, 1
      %p115 = scmp.eq.s32.totalorder %s30, 1
      %p116 = scmp.ne.s32.totalorder %s111, %s113
      %p117 = scmp.eq.s32.totalorder %s30, 0
      %p118 = por %p116, %p117
      %p119 = scmp.ne.s32.totalorder %s111, %s113
      %p120 = scmp.eq.s32.totalorder %s35, 1
      %p121 = por %p119, %p120
      %p122 = scmp.ne.s32.totalorder %s113, %s114
      %p123 = scmp.eq.s32.totalorder %s35, 0
      %p124 = por %p122, %p123
      %p125 = scmp.ne.s32.totalorder %s113, %s114
      %p126 = scmp.eq.s32.totalorder %s36, 1
      %p127 = por %p125, %p126
      %p129 = scmp.ne.s32.totalorder %s114, %s128
      %p130 = scmp.eq.s32.totalorder %s36, 0
      %p131 = por %p129, %p130
      %s132 = ssub.s32 %s30, %s37
      %p133 = scmp.eq.s32.totalorder %s132, 0
      %s135 = sadd.s32 %s134, 1
      %s136 = scalar_select %p133, %s134, %s135
      %p139 = pneg %p133
      %p140 = scmp.eq.s32.totalorder %s30, 1
      %p141 = por %p139, %p140
      %p142 = scmp.ne.s32.totalorder %s134, %s137
      %p143 = scmp.eq.s32.totalorder %s30, 0
      %p144 = por %p142, %p143
      %p145 = scmp.ne.s32.totalorder %s134, %s137
      %p146 = scmp.eq.s32.totalorder %s35, 1
      %p147 = por %p145, %p146
      %p148 = scmp.ne.s32.totalorder %s137, %s138
      %p149 = scmp.eq.s32.totalorder %s35, 0
      %p150 = por %p148, %p149
      %p151 = scmp.ne.s32.totalorder %s137, %s138
      %p152 = scmp.eq.s32.totalorder %s36, 1
      %p153 = por %p151, %p152
      %p155 = scmp.ne.s32.totalorder %s138, %s154
      %p156 = scmp.eq.s32.totalorder %s36, 0
      %p157 = por %p155, %p156
      %s158 = ssub.s32 %s30, %s37
      %p159 = scmp.eq.s32.totalorder %s158, 0
      %s161 = sadd.s32 %s160, 1
      %s162 = scalar_select %p159, %s160, %s161
      %p165 = pneg %p159
      %p166 = scmp.eq.s32.totalorder %s30, 1
      %p167 = por %p165, %p166
      %p168 = scmp.ne.s32.totalorder %s160, %s163
      %p169 = scmp.eq.s32.totalorder %s30, 0
      %p170 = por %p168, %p169
      %p171 = scmp.ne.s32.totalorder %s160, %s163
      %p172 = scmp.eq.s32.totalorder %s35, 1
      %p173 = por %p171, %p172
      %p174 = scmp.ne.s32.totalorder %s163, %s164
      %p175 = scmp.eq.s32.totalorder %s35, 0
      %p176 = por %p174, %p175
      %p177 = scmp.ne.s32.totalorder %s163, %s164
      %p178 = scmp.eq.s32.totalorder %s36, 1
      %p179 = por %p177, %p178
      %p181 = scmp.ne.s32.totalorder %s164, %s180
      %p182 = scmp.eq.s32.totalorder %s36, 0
      %p183 = por %p181, %p182
      %s185 = sadd.s32 %s184, 1
      %p188 = scmp.eq.s32.totalorder %s30, 1
      %p189 = scmp.ne.s32.totalorder %s184, %s186
      %p190 = scmp.eq.s32.totalorder %s30, 0
      %p191 = por %p189, %p190
      %p192 = scmp.ne.s32.totalorder %s184, %s186
      %p193 = scmp.eq.s32.totalorder %s35, 1
      %p194 = por %p192, %p193
      %p195 = scmp.ne.s32.totalorder %s186, %s187
      %p196 = scmp.eq.s32.totalorder %s35, 0
      %p197 = por %p195, %p196
      %p198 = scmp.ne.s32.totalorder %s186, %s187
      %p199 = scmp.eq.s32.totalorder %s36, 1
      %p200 = por %p198, %p199
      %p202 = scmp.ne.s32.totalorder %s187, %s201
      %p203 = scmp.eq.s32.totalorder %s36, 0
      %p204 = por %p202, %p203
      %s206 = sadd.s32 %s205, 1
      %p209 = scmp.eq.s32.totalorder %s30, 1
      %p210 = scmp.ne.s32.totalorder %s205, %s207
      %p211 = scmp.eq.s32.totalorder %s30, 0
      %p212 = por %p210, %p211
      %p213 = scmp.ne.s32.totalorder %s205, %s207
      %p214 = scmp.eq.s32.totalorder %s35, 1
      %p215 = por %p213, %p214
      %p216 = scmp.ne.s32.totalorder %s207, %s208
      %p217 = scmp.eq.s32.totalorder %s35, 0
      %p218 = por %p216, %p217
      %p219 = scmp.ne.s32.totalorder %s207, %s208
      %p220 = scmp.eq.s32.totalorder %s36, 1
      %p221 = por %p219, %p220
      %p223 = scmp.ne.s32.totalorder %s208, %s222
      %p224 = scmp.eq.s32.totalorder %s36, 0
      %p225 = por %p223, %p224
      %s227 = sadd.s32 %s226, 1
      %p230 = scmp.eq.s32.totalorder %s30, 1
      %p231 = scmp.ne.s32.totalorder %s226, %s228
      %p232 = scmp.eq.s32.totalorder %s30, 0
      %p233 = por %p231, %p232
      %p234 = scmp.ne.s32.totalorder %s226, %s228
      %p235 = scmp.eq.s32.totalorder %s35, 1
      %p236 = por %p234, %p235
      %p237 = scmp.ne.s32.totalorder %s228, %s229
      %p238 = scmp.eq.s32.totalorder %s35, 0
      %p239 = por %p237, %p238
      %p240 = scmp.ne.s32.totalorder %s228, %s229
      %p241 = scmp.eq.s32.totalorder %s36, 1
      %p242 = por %p240, %p241
      %p244 = scmp.ne.s32.totalorder %s229, %s243
      %p245 = scmp.eq.s32.totalorder %s36, 0
      %p246 = por %p244, %p245
      %s248 = sadd.s32 %s247, 1
      %p251 = scmp.eq.s32.totalorder %s30, 1
      %p252 = scmp.ne.s32.totalorder %s247, %s249
      %p253 = scmp.eq.s32.totalorder %s30, 0
      %p254 = por %p252, %p253
      %p255 = scmp.ne.s32.totalorder %s247, %s249
      %p256 = scmp.eq.s32.totalorder %s35, 1
      %p257 = por %p255, %p256
      %p258 = scmp.ne.s32.totalorder %s249, %s250
      %p259 = scmp.eq.s32.totalorder %s35, 0
      %p260 = por %p258, %p259
      %p261 = scmp.ne.s32.totalorder %s249, %s250
      %p262 = scmp.eq.s32.totalorder %s36, 1
      %p263 = por %p261, %p262
      %p265 = scmp.ne.s32.totalorder %s250, %s264
      %p266 = scmp.eq.s32.totalorder %s36, 0
      %p267 = por %p265, %p266
      %s269 = sadd.s32 %s268, 1
      %p272 = scmp.eq.s32.totalorder %s30, 1
      %p273 = scmp.ne.s32.totalorder %s268, %s270
      %p274 = scmp.eq.s32.totalorder %s30, 0
      %p275 = por %p273, %p274
      %p276 = scmp.ne.s32.totalorder %s268, %s270
      %p277 = scmp.eq.s32.totalorder %s35, 1
      %p278 = por %p276, %p277
      %p279 = scmp.ne.s32.totalorder %s270, %s271
      %p280 = scmp.eq.s32.totalorder %s35, 0
      %p281 = por %p279, %p280
      %p282 = scmp.ne.s32.totalorder %s270, %s271
      %p283 = scmp.eq.s32.totalorder %s36, 1
      %p284 = por %p282, %p283
      %p286 = scmp.ne.s32.totalorder %s271, %s285
      %p287 = scmp.eq.s32.totalorder %s36, 0
      %p288 = por %p286, %p287
      %s289 = ssub.s32 %s30, %s37
      %p290 = scmp.eq.s32.totalorder %s289, 0
      %s292 = sadd.s32 %s291, 1
      %s293 = scalar_select %p290, %s291, %s292
      %p296 = pneg %p290
      %p297 = scmp.eq.s32.totalorder %s30, 1
      %p298 = por %p296, %p297
      %p299 = scmp.ne.s32.totalorder %s291, %s294
      %p300 = scmp.eq.s32.totalorder %s30, 0
      %p301 = por %p299, %p300
      %p302 = scmp.ne.s32.totalorder %s291, %s294
      %p303 = scmp.eq.s32.totalorder %s35, 1
      %p304 = por %p302, %p303
      %p305 = scmp.ne.s32.totalorder %s294, %s295
      %p306 = scmp.eq.s32.totalorder %s35, 0
      %p307 = por %p305, %p306
      %p308 = scmp.ne.s32.totalorder %s294, %s295
      %p309 = scmp.eq.s32.totalorder %s36, 1
      %p310 = por %p308, %p309
      %p312 = scmp.ne.s32.totalorder %s295, %s311
      %p313 = scmp.eq.s32.totalorder %s36, 0
      %p314 = por %p312, %p313
      %s315 = ssub.s32 %s30, %s37
      %p316 = scmp.eq.s32.totalorder %s315, 0
      %s318 = sadd.s32 %s317, 1
      %s319 = scalar_select %p316, %s317, %s318
      %p322 = pneg %p316
      %p323 = scmp.eq.s32.totalorder %s30, 1
      %p324 = por %p322, %p323
      %p325 = scmp.ne.s32.totalorder %s317, %s320
      %p326 = scmp.eq.s32.totalorder %s30, 0
      %p327 = por %p325, %p326
      %p328 = scmp.ne.s32.totalorder %s317, %s320
      %p329 = scmp.eq.s32.totalorder %s35, 1
      %p330 = por %p328, %p329
      %p331 = scmp.ne.s32.totalorder %s320, %s321
      %p332 = scmp.eq.s32.totalorder %s35, 0
      %p333 = por %p331, %p332
      %p334 = scmp.ne.s32.totalorder %s320, %s321
      %p335 = scmp.eq.s32.totalorder %s36, 1
      %p336 = por %p334, %p335
      %p338 = scmp.ne.s32.totalorder %s321, %s337
      %p339 = scmp.eq.s32.totalorder %s36, 0
      %p340 = por %p338, %p339
      %p341 = scmp.le.s32.totalorder 1, %s30
      %p342 = scmp.lt.s32.totalorder %s30, 3
      %p343 = pnand %p341, %p342
      %p344 = pneg %p343
      // Predicated region
      $region9: #{tpu_custom_call.1} parent=5 // pred_check
        _
      $region10: #{tpu_custom_call.1} parent=5 // pred_check_branch
        %346 = sbr.rel (%p343) target = $region12
      $region11: #{tpu_custom_call.1} parent=5 // pred_region
        %s347 = ssub.s32 %s30, 1
        // Predicated region
        $region13: #{tpu_custom_call.1} parent=11 // pred_check
          %p348 = pneg %p77
        $region14: #{tpu_custom_call.1} parent=11 // pred_check_branch
          %350 = sbr.rel (%p348) target = $region16
        $region15: #{tpu_custom_call.1} parent=11 // pred_region
          %s352 = ssub.s32 128, 128
          %353 = vsyncadd [#allocation5], %s352
          %s355 = sshll.u32 [#allocation4], 4
          %s356 = int_to_ptr.vmem [resolvable:$true] %s355
          %358 = dma.hbm_to_vmem [thread:$0]  %s2, 128, %s356, [#allocation5]
        $region16: #{tpu_custom_call.1} parent=11 // pred_fallthru
          _
        // Predicated region
        $region17: #{tpu_custom_call.1} parent=11 // pred_check
          %p359 = pneg %p124
        $region18: #{tpu_custom_call.1} parent=11 // pred_check_branch
          %361 = sbr.rel (%p359) target = $region20
        $region19: #{tpu_custom_call.1} parent=11 // pred_region
          %s363 = ssub.s32 64, 64
          %364 = vsyncadd [#allocation8], %s363
          %s366 = sshll.u32 [#allocation7], 4
          %s367 = int_to_ptr.vmem [resolvable:$true] %s366
          %369 = dma.hbm_to_vmem [thread:$0]  %s4, 64, %s367, [#allocation8]
        $region20: #{tpu_custom_call.1} parent=11 // pred_fallthru
          _
        // Predicated region
        $region21: #{tpu_custom_call.1} parent=11 // pred_check
          %p370 = pneg %p197
        $region22: #{tpu_custom_call.1} parent=11 // pred_check_branch
          %372 = sbr.rel (%p370) target = $region24
        $region23: #{tpu_custom_call.1} parent=11 // pred_region
          _
        $region24: #{tpu_custom_call.1} parent=11 // pred_fallthru
          _
        // Predicated region
        $region25: #{tpu_custom_call.1} parent=11 // pred_check
          %p373 = pneg %p218
        $region26: #{tpu_custom_call.1} parent=11 // pred_check_branch
          %375 = sbr.rel (%p373) target = $region28
        $region27: #{tpu_custom_call.1} parent=11 // pred_region
          _
        $region28: #{tpu_custom_call.1} parent=11 // pred_fallthru
          _
        // Predicated region
        $region29: #{tpu_custom_call.1} parent=11 // pred_check
          %p376 = pneg %p239
        $region30: #{tpu_custom_call.1} parent=11 // pred_check_branch
          %378 = sbr.rel (%p376) target = $region32
        $region31: #{tpu_custom_call.1} parent=11 // pred_region
          %s380 = ssub.s32 384, 384
          %381 = vsyncadd [#allocation8], %s380
          %s382 = sshll.u32 [#allocation11], 4
          %s383 = int_to_ptr.vmem [resolvable:$true] %s382
          %388 = dma.hbm_to_vmem [thread:$0]  %s9, 384, %s383, [#allocation8], 128, 128, 8
        $region32: #{tpu_custom_call.1} parent=11 // pred_fallthru
          _
        // Predicated region
        $region33: #{tpu_custom_call.1} parent=11 // pred_check
          %p389 = pneg %p260
        $region34: #{tpu_custom_call.1} parent=11 // pred_check_branch
          %391 = sbr.rel (%p389) target = $region36
        $region35: #{tpu_custom_call.1} parent=11 // pred_region
          %s393 = ssub.s32 384, 384
          %394 = vsyncadd [#allocation13], %s393
          %s395 = sshll.u32 [#allocation12], 4
          %s396 = int_to_ptr.vmem [resolvable:$true] %s395
          %401 = dma.hbm_to_vmem [thread:$0]  %s10, 384, %s396, [#allocation13], 128, 128, 8
        $region36: #{tpu_custom_call.1} parent=11 // pred_fallthru
          _
        // Predicated region
        $region37: #{tpu_custom_call.1} parent=11 // pred_check
          %p402 = pneg %p281
        $region38: #{tpu_custom_call.1} parent=11 // pred_check_branch
          %404 = sbr.rel (%p402) target = $region40
        $region39: #{tpu_custom_call.1} parent=11 // pred_region
          _
        $region40: #{tpu_custom_call.1} parent=11 // pred_fallthru
          _
      $region12: #{tpu_custom_call.1} parent=5 // pred_fallthru
        _
      %p405 = scmp.lt.s32.totalorder %s30, 2
      // Predicated region
      $region41: #{tpu_custom_call.1} parent=5 // pred_check
        %p406 = pneg %p405
      $region42: #{tpu_custom_call.1} parent=5 // pred_check_branch
        %408 = sbr.rel (%p406) target = $region44
      $region43: #{tpu_custom_call.1} parent=5 // pred_region
        // Predicated region
        $region45: #{tpu_custom_call.1} parent=43 // pred_check
          %p409 = pneg %p50
        $region46: #{tpu_custom_call.1} parent=43 // pred_check_branch
          %411 = sbr.rel (%p409) target = $region48
        $region47: #{tpu_custom_call.1} parent=43 // pred_region
          %p412 = scmp.lt.s32.totalorder %s30, 1
          %s413 = scalar_select %p412, %s30, 1
          %s414 = smul.addr %s413, 8
          %s415 = scalar_lea.vmem %s1, %s414
        $region48: #{tpu_custom_call.1} parent=43 // pred_fallthru
          _
        // Predicated region
        $region49: #{tpu_custom_call.1} parent=43 // pred_check
          %p416 = pneg %p97
        $region50: #{tpu_custom_call.1} parent=43 // pred_check_branch
          %418 = sbr.rel (%p416) target = $region52
        $region51: #{tpu_custom_call.1} parent=43 // pred_region
          %p419 = scmp.lt.s32.totalorder %s30, 1
          %s420 = scalar_select %p419, %s30, 1
          %s421 = smul.addr %s420, 8
          %s422 = scalar_lea.vmem %s3, %s421
        $region52: #{tpu_custom_call.1} parent=43 // pred_fallthru
          _
        // Predicated region
        $region53: #{tpu_custom_call.1} parent=43 // pred_check
          %p423 = pneg %p144
        $region54: #{tpu_custom_call.1} parent=43 // pred_check_branch
          %425 = sbr.rel (%p423) target = $region56
        $region55: #{tpu_custom_call.1} parent=43 // pred_region
          %s426 = sand.u32 %s30, 1
          %s427 = scalar_lea.sflag [#allocation5], %s426
          %s428 = sand.u32 %s134, 1
          %s429 = smul.addr %s428, 8
          %s430 = scalar_lea.vmem [#allocation9], %s429
          %s432 = ssub.s32 128, 128
          %433 = vsyncadd %s427, %s432
          %s434 = smul.addr %s30, 128
          %s435 = scalar_lea.hbm %s5, %s434
          %s437 = sshll.u32 %s430, 4
          %s438 = int_to_ptr.vmem [resolvable:$true] %s437
          %440 = dma.hbm_to_vmem [thread:$0]  %s435, 128, %s438, %s427
        $region56: #{tpu_custom_call.1} parent=43 // pred_fallthru
          _
        // Predicated region
        $region57: #{tpu_custom_call.1} parent=43 // pred_check
          %p441 = pneg %p170
        $region58: #{tpu_custom_call.1} parent=43 // pred_check_branch
          %443 = sbr.rel (%p441) target = $region60
        $region59: #{tpu_custom_call.1} parent=43 // pred_region
          %s444 = sand.u32 %s30, 1
          %s445 = scalar_lea.sflag [#allocation5], %s444
          %s446 = sand.u32 %s160, 1
          %s447 = smul.addr %s446, 8
          %s448 = scalar_lea.vmem [#allocation10], %s447
          %s450 = ssub.s32 128, 128
          %451 = vsyncadd %s445, %s450
          %s452 = smul.addr %s30, 128
          %s453 = scalar_lea.hbm %s6, %s452
          %s455 = sshll.u32 %s448, 4
          %s456 = int_to_ptr.vmem [resolvable:$true] %s455
          %458 = dma.hbm_to_vmem [thread:$0]  %s453, 128, %s456, %s445
        $region60: #{tpu_custom_call.1} parent=43 // pred_fallthru
          _
      $region44: #{tpu_custom_call.1} parent=5 // pred_fallthru
        _
      %p459 = scmp.le.s32.totalorder 1, %s30
      %p460 = scmp.lt.s32.totalorder %s30, 3
      %p461 = pnand %p459, %p460
      %p462 = pneg %p461
      // Predicated region
      $region61: #{tpu_custom_call.1} parent=5 // pred_check
        _
      $region62: #{tpu_custom_call.1} parent=5 // pred_check_branch
        %464 = sbr.rel (%p461) target = $region64
      $region63: #{tpu_custom_call.1} parent=5 // pred_region
        %s465 = ssub.s32 %s30, 1
        // Predicated region
        $region65: #{tpu_custom_call.1} parent=63 // pred_check
          %p466 = pneg %p77
        $region66: #{tpu_custom_call.1} parent=63 // pred_check_branch
          %468 = sbr.rel (%p466) target = $region68
        $region67: #{tpu_custom_call.1} parent=63 // pred_region
          %469 = dma.done [#allocation5], 128
        $region68: #{tpu_custom_call.1} parent=63 // pred_fallthru
          _
        // Predicated region
        $region69: #{tpu_custom_call.1} parent=63 // pred_check
          %p470 = pneg %p124
        $region70: #{tpu_custom_call.1} parent=63 // pred_check_branch
          %472 = sbr.rel (%p470) target = $region72
        $region71: #{tpu_custom_call.1} parent=63 // pred_region
          %473 = dma.done [#allocation8], 64
        $region72: #{tpu_custom_call.1} parent=63 // pred_fallthru
          _
        %s474 = sand.u32 %s35, 1
        %s475 = scalar_lea.sflag [#allocation5], %s474
        %s476 = sand.u32 %s137, 1
        %s477 = smul.addr %s476, 8
        %s478 = scalar_lea.vmem [#allocation9], %s477
        // Predicated region
        $region73: #{tpu_custom_call.1} parent=63 // pred_check
          %p479 = pneg %p150
        $region74: #{tpu_custom_call.1} parent=63 // pred_check_branch
          %481 = sbr.rel (%p479) target = $region76
        $region75: #{tpu_custom_call.1} parent=63 // pred_region
          %482 = dma.done %s475, 128
        $region76: #{tpu_custom_call.1} parent=63 // pred_fallthru
          _
        %s483 = sand.u32 %s35, 1
        %s484 = scalar_lea.sflag [#allocation5], %s483
        %s485 = sand.u32 %s163, 1
        %s486 = smul.addr %s485, 8
        %s487 = scalar_lea.vmem [#allocation10], %s486
        // Predicated region
        $region77: #{tpu_custom_call.1} parent=63 // pred_check
          %p488 = pneg %p176
        $region78: #{tpu_custom_call.1} parent=63 // pred_check_branch
          %490 = sbr.rel (%p488) target = $region80
        $region79: #{tpu_custom_call.1} parent=63 // pred_region
          %491 = dma.done %s484, 128
        $region80: #{tpu_custom_call.1} parent=63 // pred_fallthru
          _
        // Predicated region
        $region81: #{tpu_custom_call.1} parent=63 // pred_check
          %p492 = pneg %p239
        $region82: #{tpu_custom_call.1} parent=63 // pred_check_branch
          %494 = sbr.rel (%p492) target = $region84
        $region83: #{tpu_custom_call.1} parent=63 // pred_region
          %495 = dma.done [#allocation8], 384
        $region84: #{tpu_custom_call.1} parent=63 // pred_fallthru
          _
        // Predicated region
        $region85: #{tpu_custom_call.1} parent=63 // pred_check
          %p496 = pneg %p260
        $region86: #{tpu_custom_call.1} parent=63 // pred_check_branch
          %498 = sbr.rel (%p496) target = $region88
        $region87: #{tpu_custom_call.1} parent=63 // pred_region
          %499 = dma.done [#allocation13], 384
        $region88: #{tpu_custom_call.1} parent=63 // pred_fallthru
          _
        %p500 = scmp.lt.s32.totalorder %s35, 1
        %s501 = scalar_select %p500, %s35, 1
        %s502 = smul.addr %s501, 8
        %s503 = scalar_lea.vmem %s1, %s502
        %p504 = pneg %p56
        %p505 = pneg %p53
        %p506 = pneg %p77
        %p507 = pneg %p74
        %p508 = scmp.lt.s32.totalorder %s35, 1
        %s509 = scalar_select %p508, %s35, 1
        %s510 = smul.addr %s509, 8
        %s511 = scalar_lea.vmem %s3, %s510
        %p512 = pneg %p103
        %p513 = pneg %p100
        %p514 = pneg %p124
        %p515 = pneg %p121
        %s516 = sand.u32 %s35, 1
        %s517 = scalar_lea.sflag [#allocation5], %s516
        %s518 = sand.u32 %s137, 1
        %s519 = smul.addr %s518, 8
        %s520 = scalar_lea.vmem [#allocation9], %s519
        %p521 = pneg %p150
        %p522 = pneg %p147
        %s523 = sand.u32 %s35, 1
        %s524 = scalar_lea.sflag [#allocation5], %s523
        %s525 = sand.u32 %s163, 1
        %s526 = smul.addr %s525, 8
        %s527 = scalar_lea.vmem [#allocation10], %s526
        %p528 = pneg %p176
        %p529 = pneg %p173
        %p530 = pneg %p197
        %p531 = pneg %p194
        %p532 = pneg %p218
        %p533 = pneg %p215
        %p534 = pneg %p239
        %p535 = pneg %p236
        %p536 = pneg %p260
        %p537 = pneg %p257
        %p538 = pneg %p281
        %p539 = pneg %p278
        %p540 = pneg %p307
        %p541 = pneg %p304
        %s542 = sand.u32 %s294, 1
        %s543 = scalar_lea.sflag [#allocation6], %s542
        %s544 = sand.u32 %s294, 1
        %s545 = smul.addr %s544, 8
        %s546 = scalar_lea.vmem [#allocation14], %s545
        %p547 = pneg %p333
        %p548 = pneg %p330
        %s549 = sand.u32 %s320, 1
        %s550 = scalar_lea.sflag [#allocation16], %s549
        %s551 = sand.u32 %s320, 1
        %s552 = smul.addr %s551, 4
        %s553 = scalar_lea.vmem [#allocation15], %s552
        %p554 = scmp.lt.s32.totalorder %s35, 1
        %s555 = scalar_select %p554, %s35, 1
        %s556 = smul.addr %s555, 8
        %s557 = scalar_lea.vmem %s1, %s556
        %p558 = scmp.lt.s32.totalorder %s35, 1
        %s559 = scalar_select %p558, %s35, 1
        %s560 = smul.addr %s559, 8
        %s561 = scalar_lea.vmem %s3, %s560
        %s562 = smul.u32 %s35, 8
        %v563 = vlaneseq
        %v564 = vshrl.u32 %v563, 7
        %v565 = vstv %s562
        %v566 = vadd.s32 %v565, %v564
        %v567 = vlaneseq
        %v568 = vand.u32 %v567, 127
        %vm569 = vcmp.lt.s32.totalorder %v566, 16
        %vm570 = vcmp.lt.s32.totalorder %v568, 5
        %v571 = vsel %vm569, 1, 0
        %vm572 = vcmp.eq.s32.totalorder %v571, 1
        %v573 = vsel %vm570, 1, 0
        %vm574 = vcmp.eq.s32.totalorder %v573, 1
        %vm575 = vmand %vm572, %vm574
        %v576 = vld [vmem:[%s557] sm:$0xff]
        %v577 = vld [vmem:[#allocation4] sm:$0xff]
        %vm578 = vcmask 64512
        %v580 = vsel %vm578, %v576, 0
        %582 = vmatprep.subr.mxu0 0.0
        %583 = vmatpush1.msra.mxu0 0.0
        %584 = vmatprep.subr.mxu0 0.0
        %585 = vmatpush1.msra.mxu0 0.0
        %586 = vmatprep.subr.mxu0 0.0
        %587 = vmatpush1.msra.mxu0 0.0
        %588 = vmatprep.subr.mxu0 0.0
        %589 = vmatpush1.msra.mxu0 0.0
        %590 = vmatprep.subr.mxu0 0.0
        %591 = vmatpush1.msra.mxu0 0.0
        %592 = vmatprep.subr.mxu0 0.0
        %593 = vmatpush1.msra.mxu0 0.0
        %594 = vmatprep.subr.mxu0 0.0
        %595 = vmatpush1.msra.mxu0 0.0
        %596 = vmatprep.subr.mxu0 0.0
        %597 = vmatpush1.msra.mxu0 0.0
        %598 = vmatprep.subr.mxu0 0.0
        %599 = vmatpush1.msra.mxu0 0.0
        %600 = vmatprep.subr.mxu0 0.0
        %601 = vmatpush1.msra.mxu0 0.0
        %602 = vmatprep.subr.mxu0 0.0
        %603 = vmatpush1.msra.mxu0 0.0
        %604 = vmatprep.subr.mxu0 0.0
        %605 = vmatpush1.msra.mxu0 0.0
        %606 = vmatprep.subr.mxu0 0.0
        %607 = vmatpush1.msra.mxu0 0.0
        %608 = vmatprep.subr.mxu0 0.0
        %609 = vmatpush1.msra.mxu0 0.0
        %610 = vmatprep.subr.mxu0 0.0
        %611 = vmatpush1.msra.mxu0 0.0
        %612 = vmatprep.subr.mxu0 0.0
        %613 = vmatpush1.msra.mxu0 %v577
        %614 = vmatprep.subr.mxu0 0.0
        %615 = vmatpush2.msra.mxu0 0.0
        %616 = vmatprep.subr.mxu0 0.0
        %617 = vmatpush2.msra.mxu0 0.0
        %618 = vmatprep.subr.mxu0 0.0
        %619 = vmatpush2.msra.mxu0 0.0
        %620 = vmatprep.subr.mxu0 0.0
        %621 = vmatpush2.msra.mxu0 0.0
        %622 = vmatprep.subr.mxu0 0.0
        %623 = vmatpush2.msra.mxu0 0.0
        %624 = vmatprep.subr.mxu0 0.0
        %625 = vmatpush2.msra.mxu0 0.0
        %626 = vmatprep.subr.mxu0 0.0
        %627 = vmatpush2.msra.mxu0 0.0
        %628 = vmatprep.subr.mxu0 0.0
        %629 = vmatpush2.msra.mxu0 0.0
        %630 = vmatprep.subr.mxu0 0.0
        %631 = vmatpush2.msra.mxu0 0.0
        %632 = vmatprep.subr.mxu0 0.0
        %633 = vmatpush2.msra.mxu0 0.0
        %634 = vmatprep.subr.mxu0 0.0
        %635 = vmatpush2.msra.mxu0 0.0
        %636 = vmatprep.subr.mxu0 0.0
        %637 = vmatpush2.msra.mxu0 0.0
        %638 = vmatprep.subr.mxu0 0.0
        %639 = vmatpush2.msra.mxu0 0.0
        %640 = vmatprep.subr.mxu0 0.0
        %641 = vmatpush2.msra.mxu0 0.0
        %642 = vmatprep.subr.mxu0 0.0
        %643 = vmatpush2.msra.mxu0 0.0
        %644 = vmatprep.subr.mxu0 0.0
        %645 = vmatpush2.msra.mxu0 0.0
        %646 = vmatprep.mubr.f32.mxu0 0.0
        %647 = vmatmul.mubr.f32.gmra.mxu0 %v580
        %v648 = vpop.f32.mrf.mxu0
        %v649 = vadd.f32 0.0, %v648
        %v650 = vpop.f32.mrf.mxu0
        %651 = vdwg.mxu0
        %v652 = vxor.u32 %v649, 2147483648
        %v653 = vmul.f32 %v652, 1.442695
        %v654 = vpow.pop %v653
        %v655 = vadd.f32 %v654, 1.0
        %v656 = vrcp.pop %v655
        %v657 = vmul.f32 1.0, %v656
        %v658 = vsub.f32 1.0, %v657
        %v659 = vmul.f32 %v657, %v657
        %v660 = vmul.f32 %v659, 0.75
        %v661 = vadd.f32 %v658, 1e-08
        %v662 = vlog2.pop %v661
        %v663 = vmul.f32 %v662, 0.6931472
        %v664 = vsub.f32 0.0, %v663
        %v665 = vmul.f32 %v660, %v664
        %v666 = vmul.f32 %v658, %v658
        %v667 = vmul.f32 %v666, 0.25
        %v668 = vadd.f32 %v657, 1e-08
        %v669 = vlog2.pop %v668
        %v670 = vmul.f32 %v669, 0.6931472
        %v671 = vsub.f32 0.0, %v670
        %v672 = vmul.f32 %v667, %v671
        %v673 = vsub.f32 %v672, %v665
        %674 = vst [vmem:[%s546] sm:$0xff] %v673
        %v675 = vsel %vm575, %v673, 0.0
        %v676 = vrot.slane %v675, 4
        %v677 = vadd.f32 %v675, %v676
        %v678 = vrot.slane %v677, 2
        %v679 = vadd.f32 %v677, %v678
        %v680 = vrot.slane %v679, 1
        %v681 = vadd.f32 %v679, %v680
        %vm682 = vcmask 1040384
        %v683 = vsel %vm682, %v681, 0.0
        %vm684 = vcmask 1041408
        %v685 = vsel %vm684, %v683, 0.0
        %vm686 = vcmask 1042432
        %v687 = vsel %vm686, %v685, 0.0
        %688 = vst [vmem:[%s553] sm:$0xf] %v687
        %s689 = sld [smem:[#allocation3]]
        %p690 = scmp.eq.s32.totalorder %s689, 0
        // Predicated region
        $region89: #{tpu_custom_call.1} parent=63 // pred_check
          %p691 = pneg %p690
        $region90: #{tpu_custom_call.1} parent=63 // pred_check_branch
          %693 = sbr.rel (%p691) target = $region92
        $region91: #{tpu_custom_call.1} parent=63 // pred_region
          %v694 = vld [vmem:[%s561] sm:$0xff]
          %v695 = vld [vmem:[#allocation7] sm:$0xf]
          %697 = vset.pattern.permute.xlu0 0
          %698 = vperm.xlu0 %697, %v694
          %v699 = vpop.permute.xlu0 %698
          %v701 = vlaneseq
          %v702 = vshrl.u32 %v701, 7
          %v703 = vsub.s32 0, %v702
          %v704 = vrot.slane %v695, %v703
          %v705 = vsub.f32 %v699, %v704
          %v706 = vand.u32 2147483647, %v705
          %707 = vset.pattern.permute.xlu0 1
          %708 = vperm.xlu0 %707, %v694
          %v709 = vpop.permute.xlu0 %708
          %v711 = vlaneseq
          %v712 = vshrl.u32 %v711, 7
          %v713 = vsub.s32 1, %v712
          %v714 = vrot.slane %v695, %v713
          %v715 = vsub.f32 %v709, %v714
          %v716 = vand.u32 2147483647, %v715
          %v717 = vadd.f32 %v706, %v716
          %718 = vset.pattern.permute.xlu0 2
          %719 = vperm.xlu0 %718, %v694
          %v720 = vpop.permute.xlu0 %719
          %v722 = vlaneseq
          %v723 = vshrl.u32 %v722, 7
          %v724 = vsub.s32 2, %v723
          %v725 = vrot.slane %v695, %v724
          %v726 = vsub.f32 %v720, %v725
          %v727 = vand.u32 2147483647, %v726
          %v728 = vadd.f32 %v717, %v727
          %729 = vset.pattern.permute.xlu0 3
          %730 = vperm.xlu0 %729, %v694
          %v731 = vpop.permute.xlu0 %730
          %v733 = vlaneseq
          %v734 = vshrl.u32 %v733, 7
          %v735 = vsub.s32 3, %v734
          %v736 = vrot.slane %v695, %v735
          %v737 = vsub.f32 %v731, %v736
          %v738 = vand.u32 2147483647, %v737
          %v739 = vadd.f32 %v728, %v738
          %v740 = vmul.f32 %v694, 0.5
          %742 = vrot.lane.b32.xlu0 %v740, 126
          %v743 = vpop.permute.xlu0 %742
          %v745 = vsub.f32 %v694, %v743
          %v746 = vadd.f32 %v694, %v743
          %v747 = vmul.f32 %v695, 0.5
          %v749 = vrot.slane %v747, 2
          %v751 = vsub.f32 %v695, %v749
          %v752 = vadd.f32 %v695, %v749
          %v753 = vsub.f32 %v746, %v745
          %755 = vrot.lane.b32.xlu0 %v753, 127
          %v756 = vpop.permute.xlu0 %755
          %v758 = vmul.f32 %v753, %v756
          %v759 = vsub.f32 %v752, %v751
          %v761 = vrot.slane %v759, 1
          %v763 = vmul.f32 %v759, %v761
          %765 = vset.pattern.permute.xlu0 0
          %766 = vperm.xlu0 %765, %v746
          %v767 = vpop.permute.xlu0 %766
          %v769 = vlaneseq
          %v770 = vshrl.u32 %v769, 7
          %v771 = vsub.s32 0, %v770
          %v772 = vrot.slane %v752, %v771
          %v773 = vmin.f32 %v767, %v772
          %775 = vset.pattern.permute.xlu0 0
          %776 = vperm.xlu0 %775, %v745
          %v777 = vpop.permute.xlu0 %776
          %v779 = vlaneseq
          %v780 = vshrl.u32 %v779, 7
          %v781 = vsub.s32 0, %v780
          %v782 = vrot.slane %v751, %v781
          %v783 = vmax.f32 %v777, %v782
          %v784 = vsub.f32 %v773, %v783
          %v785 = vmax.f32 %v784, 0.0
          %786 = vset.pattern.permute.xlu0 1
          %787 = vperm.xlu0 %786, %v746
          %v788 = vpop.permute.xlu0 %787
          %v790 = vlaneseq
          %v791 = vshrl.u32 %v790, 7
          %v792 = vsub.s32 1, %v791
          %v793 = vrot.slane %v752, %v792
          %v794 = vmin.f32 %v788, %v793
          %795 = vset.pattern.permute.xlu0 1
          %796 = vperm.xlu0 %795, %v745
          %v797 = vpop.permute.xlu0 %796
          %v799 = vlaneseq
          %v800 = vshrl.u32 %v799, 7
          %v801 = vsub.s32 1, %v800
          %v802 = vrot.slane %v751, %v801
          %v803 = vmax.f32 %v797, %v802
          %v804 = vsub.f32 %v794, %v803
          %v805 = vmax.f32 %v804, 0.0
          %v806 = vmul.f32 %v785, %v805
          %808 = vset.pattern.permute.xlu0 0
          %809 = vperm.xlu0 %808, %v758
          %v810 = vpop.permute.xlu0 %809
          %v812 = vlaneseq
          %v813 = vshrl.u32 %v812, 7
          %v814 = vsub.s32 0, %v813
          %v815 = vrot.slane %v763, %v814
          %v816 = vadd.f32 %v810, %v815
          %v817 = vsub.f32 %v816, %v806
          %v818 = vrcp.pop %v817
          %v819 = vmul.f32 %v806, %v818
          %v820 = vmax.f32 %v767, %v772
          %v821 = vmin.f32 %v777, %v782
          %v822 = vsub.f32 %v820, %v821
          %v823 = vmax.f32 %v822, 0.0
          %v824 = vmax.f32 %v788, %v793
          %v825 = vmin.f32 %v797, %v802
          %v826 = vsub.f32 %v824, %v825
          %v827 = vmax.f32 %v826, 0.0
          %v828 = vmul.f32 %v823, %v827
          %v829 = vsub.f32 %v828, %v817
          %v830 = vrcp.pop %v828
          %v831 = vmul.f32 %v829, %v830
          %v832 = vsub.f32 %v819, %v831
          %v833 = vsub.f32 0.0, %v832
          %v834 = vld [vmem:[%s546] sm:$0xff]
          %v835 = vadd.f32 %v739, %v833
          %v836 = vadd.f32 %v834, %v835
          %837 = vst [vmem:[%s546] sm:$0xff] %v836
          %v838 = vsel %vm575, %v739, 0.0
          %v839 = vrot.slane %v838, 4
          %v840 = vadd.f32 %v838, %v839
          %v841 = vrot.slane %v840, 2
          %v842 = vadd.f32 %v840, %v841
          %v843 = vrot.slane %v842, 1
          %v844 = vadd.f32 %v842, %v843
          %845 = vst [vmem:[%s553 + $0x1] sm:$0x1] %v844
          %v846 = vsel %vm575, %v833, 0.0
          %v847 = vrot.slane %v846, 4
          %v848 = vadd.f32 %v846, %v847
          %v849 = vrot.slane %v848, 2
          %v850 = vadd.f32 %v848, %v849
          %v851 = vrot.slane %v850, 1
          %v852 = vadd.f32 %v850, %v851
          %853 = vst [vmem:[%s553 + $0x2] sm:$0x1] %v852
        $region92: #{tpu_custom_call.1} parent=63 // pred_fallthru
          _
        %s854 = sld [smem:[#allocation3]]
        %p855 = scmp.gt.s32.totalorder %s854, 0
        // Predicated region
        $region93: #{tpu_custom_call.1} parent=63 // pred_check
          %p856 = pneg %p855
        $region94: #{tpu_custom_call.1} parent=63 // pred_check_branch
          %858 = sbr.rel (%p856) target = $region96
        $region95: #{tpu_custom_call.1} parent=63 // pred_region
          %v859 = vld [vmem:[%s478] sm:$0xff]
          %v860 = vld [vmem:[%s487] sm:$0xff]
          %v861 = vld [vmem:[%s7] sm:$0xff]
          %v862 = vld [vmem:[%s7 + $0x8] sm:$0xff]
          %v863 = vld [vmem:[%s7 + $0x10] sm:$0x1]
          %v864 = vld [vmem:[%s8] sm:$0xff]
          %v865 = vld [vmem:[%s8 + $0x8] sm:$0xff]
          %v866 = vld [vmem:[%s8 + $0x10] sm:$0x1]
          %v867 = vld [vmem:[#allocation11] sm:$0xff]
          %v868 = vld [vmem:[#allocation11 + $0x8] sm:$0xff]
          %v869 = vld [vmem:[#allocation11 + $0x10] sm:$0x1]
          %v870 = vld [vmem:[#allocation12] sm:$0xff]
          %v871 = vld [vmem:[#allocation12 + $0x8] sm:$0xff]
          %v872 = vld [vmem:[#allocation12 + $0x10] sm:$0x1]
          %874 = vset.pattern.permute.xlu0 0
          %875 = vperm.xlu0 %874, %v859
          %v876 = vpop.permute.xlu0 %875
          %v878 = vlaneseq
          %v879 = vshrl.u32 %v878, 7
          %v880 = vsub.s32 0, %v879
          %v881 = vrot.slane %v861, %v880
          %v882 = vsub.f32 %v876, %v881
          %884 = vset.pattern.permute.xlu0 0
          %885 = vperm.xlu0 %884, %v860
          %v886 = vpop.permute.xlu0 %885
          %v888 = vlaneseq
          %v889 = vshrl.u32 %v888, 7
          %v890 = vsub.s32 0, %v889
          %v891 = vrot.slane %v864, %v890
          %v892 = vsub.f32 %v886, %v891
          %v893 = vmul.f32 %v882, %v882
          %v894 = vmul.f32 %v892, %v892
          %v895 = vadd.f32 %v893, %v894
          %v896 = vlaneseq
          %v897 = vshrl.u32 %v896, 7
          %v898 = vsub.s32 0, %v897
          %v899 = vrot.slane %v870, %v898
          %v900 = vmul.f32 %v895, %v899
          %v901 = vsub.f32 0.0, %v900
          %v902 = vmul.f32 %v901, 1.442695
          %v903 = vpow.pop %v902
          %v904 = vlaneseq
          %v905 = vshrl.u32 %v904, 7
          %v906 = vsub.s32 0, %v905
          %v907 = vrot.slane %v867, %v906
          %v908 = vmul.f32 %v903, %v907
          %v909 = vadd.f32 %v908, 0.0
          %v910 = vand.u32 2147483647, %v882
          %v911 = vand.u32 2147483647, %v892
          %v912 = vadd.f32 %v910, %v911
          %v913 = vmul.f32 %v912, %v907
          %v914 = vadd.f32 %v913, 0.0
          %915 = vset.pattern.permute.xlu0 1
          %916 = vperm.xlu0 %915, %v859
          %v917 = vpop.permute.xlu0 %916
          %v919 = vlaneseq
          %v920 = vshrl.u32 %v919, 7
          %v921 = vsub.s32 1, %v920
          %v922 = vrot.slane %v861, %v921
          %v923 = vsub.f32 %v917, %v922
          %924 = vset.pattern.permute.xlu0 1
          %925 = vperm.xlu0 %924, %v860
          %v926 = vpop.permute.xlu0 %925
          %v928 = vlaneseq
          %v929 = vshrl.u32 %v928, 7
          %v930 = vsub.s32 1, %v929
          %v931 = vrot.slane %v864, %v930
          %v932 = vsub.f32 %v926, %v931
          %v933 = vmul.f32 %v923, %v923
          %v934 = vmul.f32 %v932, %v932
          %v935 = vadd.f32 %v933, %v934
          %v936 = vlaneseq
          %v937 = vshrl.u32 %v936, 7
          %v938 = vsub.s32 1, %v937
          %v939 = vrot.slane %v870, %v938
          %v940 = vmul.f32 %v935, %v939
          %v941 = vsub.f32 0.0, %v940
          %v942 = vmul.f32 %v941, 1.442695
          %v943 = vpow.pop %v942
          %v944 = vlaneseq
          %v945 = vshrl.u32 %v944, 7
          %v946 = vsub.s32 1, %v945
          %v947 = vrot.slane %v867, %v946
          %v948 = vmul.f32 %v943, %v947
          %v949 = vadd.f32 %v909, %v948
          %v950 = vand.u32 2147483647, %v923
          %v951 = vand.u32 2147483647, %v932
          %v952 = vadd.f32 %v950, %v951
          %v953 = vmul.f32 %v952, %v947
          %v954 = vadd.f32 %v914, %v953
          %955 = vset.pattern.permute.xlu0 2
          %956 = vperm.xlu0 %955, %v859
          %v957 = vpop.permute.xlu0 %956
          %v959 = vlaneseq
          %v960 = vshrl.u32 %v959, 7
          %v961 = vsub.s32 2, %v960
          %v962 = vrot.slane %v861, %v961
          %v963 = vsub.f32 %v957, %v962
          %964 = vset.pattern.permute.xlu0 2
          %965 = vperm.xlu0 %964, %v860
          %v966 = vpop.permute.xlu0 %965
          %v968 = vlaneseq
          %v969 = vshrl.u32 %v968, 7
          %v970 = vsub.s32 2, %v969
          %v971 = vrot.slane %v864, %v970
          %v972 = vsub.f32 %v966, %v971
          %v973 = vmul.f32 %v963, %v963
          %v974 = vmul.f32 %v972, %v972
          %v975 = vadd.f32 %v973, %v974
          %v976 = vlaneseq
          %v977 = vshrl.u32 %v976, 7
          %v978 = vsub.s32 2, %v977
          %v979 = vrot.slane %v870, %v978
          %v980 = vmul.f32 %v975, %v979
          %v981 = vsub.f32 0.0, %v980
          %v982 = vmul.f32 %v981, 1.442695
          %v983 = vpow.pop %v982
          %v984 = vlaneseq
          %v985 = vshrl.u32 %v984, 7
          %v986 = vsub.s32 2, %v985
          %v987 = vrot.slane %v867, %v986
          %v988 = vmul.f32 %v983, %v987
          %v989 = vadd.f32 %v949, %v988
          %v990 = vand.u32 2147483647, %v963
          %v991 = vand.u32 2147483647, %v972
          %v992 = vadd.f32 %v990, %v991
          %v993 = vmul.f32 %v992, %v987
          %v994 = vadd.f32 %v954, %v993
          %995 = vset.pattern.permute.xlu0 3
          %996 = vperm.xlu0 %995, %v859
          %v997 = vpop.permute.xlu0 %996
          %v999 = vlaneseq
          %v1000 = vshrl.u32 %v999, 7
          %v1001 = vsub.s32 3, %v1000
          %v1002 = vrot.slane %v861, %v1001
          %v1003 = vsub.f32 %v997, %v1002
          %1004 = vset.pattern.permute.xlu0 3
          %1005 = vperm.xlu0 %1004, %v860
          %v1006 = vpop.permute.xlu0 %1005
          %v1008 = vlaneseq
          %v1009 = vshrl.u32 %v1008, 7
          %v1010 = vsub.s32 3, %v1009
          %v1011 = vrot.slane %v864, %v1010
          %v1012 = vsub.f32 %v1006, %v1011
          %v1013 = vmul.f32 %v1003, %v1003
          %v1014 = vmul.f32 %v1012, %v1012
          %v1015 = vadd.f32 %v1013, %v1014
          %v1016 = vlaneseq
          %v1017 = vshrl.u32 %v1016, 7
          %v1018 = vsub.s32 3, %v1017
          %v1019 = vrot.slane %v870, %v1018
          %v1020 = vmul.f32 %v1015, %v1019
          %v1021 = vsub.f32 0.0, %v1020
          %v1022 = vmul.f32 %v1021, 1.442695
          %v1023 = vpow.pop %v1022
          %v1024 = vlaneseq
          %v1025 = vshrl.u32 %v1024, 7
          %v1026 = vsub.s32 3, %v1025
          %v1027 = vrot.slane %v867, %v1026
          %v1028 = vmul.f32 %v1023, %v1027
          %v1029 = vadd.f32 %v989, %v1028
          %v1030 = vand.u32 2147483647, %v1003
          %v1031 = vand.u32 2147483647, %v1012
          %v1032 = vadd.f32 %v1030, %v1031
          %v1033 = vmul.f32 %v1032, %v1027
          %v1034 = vadd.f32 %v994, %v1033
          %1035 = vset.pattern.permute.xlu0 4
          %1036 = vperm.xlu0 %1035, %v859
          %v1037 = vpop.permute.xlu0 %1036
          %v1039 = vlaneseq
          %v1040 = vshrl.u32 %v1039, 7
          %v1041 = vsub.s32 4, %v1040
          %v1042 = vrot.slane %v861, %v1041
          %v1043 = vsub.f32 %v1037, %v1042
          %1044 = vset.pattern.permute.xlu0 4
          %1045 = vperm.xlu0 %1044, %v860
          %v1046 = vpop.permute.xlu0 %1045
          %v1048 = vlaneseq
          %v1049 = vshrl.u32 %v1048, 7
          %v1050 = vsub.s32 4, %v1049
          %v1051 = vrot.slane %v864, %v1050
          %v1052 = vsub.f32 %v1046, %v1051
          %v1053 = vmul.f32 %v1043, %v1043
          %v1054 = vmul.f32 %v1052, %v1052
          %v1055 = vadd.f32 %v1053, %v1054
          %v1056 = vlaneseq
          %v1057 = vshrl.u32 %v1056, 7
          %v1058 = vsub.s32 4, %v1057
          %v1059 = vrot.slane %v870, %v1058
          %v1060 = vmul.f32 %v1055, %v1059
          %v1061 = vsub.f32 0.0, %v1060
          %v1062 = vmul.f32 %v1061, 1.442695
          %v1063 = vpow.pop %v1062
          %v1064 = vlaneseq
          %v1065 = vshrl.u32 %v1064, 7
          %v1066 = vsub.s32 4, %v1065
          %v1067 = vrot.slane %v867, %v1066
          %v1068 = vmul.f32 %v1063, %v1067
          %v1069 = vadd.f32 %v1029, %v1068
          %v1070 = vand.u32 2147483647, %v1043
          %v1071 = vand.u32 2147483647, %v1052
          %v1072 = vadd.f32 %v1070, %v1071
          %v1073 = vmul.f32 %v1072, %v1067
          %v1074 = vadd.f32 %v1034, %v1073
          %1075 = vset.pattern.permute.xlu0 5
          %1076 = vperm.xlu0 %1075, %v859
          %v1077 = vpop.permute.xlu0 %1076
          %v1079 = vlaneseq
          %v1080 = vshrl.u32 %v1079, 7
          %v1081 = vsub.s32 5, %v1080
          %v1082 = vrot.slane %v861, %v1081
          %v1083 = vsub.f32 %v1077, %v1082
          %1084 = vset.pattern.permute.xlu0 5
          %1085 = vperm.xlu0 %1084, %v860
          %v1086 = vpop.permute.xlu0 %1085
          %v1088 = vlaneseq
          %v1089 = vshrl.u32 %v1088, 7
          %v1090 = vsub.s32 5, %v1089
          %v1091 = vrot.slane %v864, %v1090
          %v1092 = vsub.f32 %v1086, %v1091
          %v1093 = vmul.f32 %v1083, %v1083
          %v1094 = vmul.f32 %v1092, %v1092
          %v1095 = vadd.f32 %v1093, %v1094
          %v1096 = vlaneseq
          %v1097 = vshrl.u32 %v1096, 7
          %v1098 = vsub.s32 5, %v1097
          %v1099 = vrot.slane %v870, %v1098
          %v1100 = vmul.f32 %v1095, %v1099
          %v1101 = vsub.f32 0.0, %v1100
          %v1102 = vmul.f32 %v1101, 1.442695
          %v1103 = vpow.pop %v1102
          %v1104 = vlaneseq
          %v1105 = vshrl.u32 %v1104, 7
          %v1106 = vsub.s32 5, %v1105
          %v1107 = vrot.slane %v867, %v1106
          %v1108 = vmul.f32 %v1103, %v1107
          %v1109 = vadd.f32 %v1069, %v1108
          %v1110 = vand.u32 2147483647, %v1083
          %v1111 = vand.u32 2147483647, %v1092
          %v1112 = vadd.f32 %v1110, %v1111
          %v1113 = vmul.f32 %v1112, %v1107
          %v1114 = vadd.f32 %v1074, %v1113
          %1115 = vset.pattern.permute.xlu0 6
          %1116 = vperm.xlu0 %1115, %v859
          %v1117 = vpop.permute.xlu0 %1116
          %v1119 = vlaneseq
          %v1120 = vshrl.u32 %v1119, 7
          %v1121 = vsub.s32 6, %v1120
          %v1122 = vrot.slane %v861, %v1121
          %v1123 = vsub.f32 %v1117, %v1122
          %1124 = vset.pattern.permute.xlu0 6
          %1125 = vperm.xlu0 %1124, %v860
          %v1126 = vpop.permute.xlu0 %1125
          %v1128 = vlaneseq
          %v1129 = vshrl.u32 %v1128, 7
          %v1130 = vsub.s32 6, %v1129
          %v1131 = vrot.slane %v864, %v1130
          %v1132 = vsub.f32 %v1126, %v1131
          %v1133 = vmul.f32 %v1123, %v1123
          %v1134 = vmul.f32 %v1132, %v1132
          %v1135 = vadd.f32 %v1133, %v1134
          %v1136 = vlaneseq
          %v1137 = vshrl.u32 %v1136, 7
          %v1138 = vsub.s32 6, %v1137
          %v1139 = vrot.slane %v870, %v1138
          %v1140 = vmul.f32 %v1135, %v1139
          %v1141 = vsub.f32 0.0, %v1140
          %v1142 = vmul.f32 %v1141, 1.442695
          %v1143 = vpow.pop %v1142
          %v1144 = vlaneseq
          %v1145 = vshrl.u32 %v1144, 7
          %v1146 = vsub.s32 6, %v1145
          %v1147 = vrot.slane %v867, %v1146
          %v1148 = vmul.f32 %v1143, %v1147
          %v1149 = vadd.f32 %v1109, %v1148
          %v1150 = vand.u32 2147483647, %v1123
          %v1151 = vand.u32 2147483647, %v1132
          %v1152 = vadd.f32 %v1150, %v1151
          %v1153 = vmul.f32 %v1152, %v1147
          %v1154 = vadd.f32 %v1114, %v1153
          %1155 = vset.pattern.permute.xlu0 7
          %1156 = vperm.xlu0 %1155, %v859
          %v1157 = vpop.permute.xlu0 %1156
          %v1159 = vlaneseq
          %v1160 = vshrl.u32 %v1159, 7
          %v1161 = vsub.s32 7, %v1160
          %v1162 = vrot.slane %v861, %v1161
          %v1163 = vsub.f32 %v1157, %v1162
          %1164 = vset.pattern.permute.xlu0 7
          %1165 = vperm.xlu0 %1164, %v860
          %v1166 = vpop.permute.xlu0 %1165
          %v1168 = vlaneseq
          %v1169 = vshrl.u32 %v1168, 7
          %v1170 = vsub.s32 7, %v1169
          %v1171 = vrot.slane %v864, %v1170
          %v1172 = vsub.f32 %v1166, %v1171
          %v1173 = vmul.f32 %v1163, %v1163
          %v1174 = vmul.f32 %v1172, %v1172
          %v1175 = vadd.f32 %v1173, %v1174
          %v1176 = vlaneseq
          %v1177 = vshrl.u32 %v1176, 7
          %v1178 = vsub.s32 7, %v1177
          %v1179 = vrot.slane %v870, %v1178
          %v1180 = vmul.f32 %v1175, %v1179
          %v1181 = vsub.f32 0.0, %v1180
          %v1182 = vmul.f32 %v1181, 1.442695
          %v1183 = vpow.pop %v1182
          %v1184 = vlaneseq
          %v1185 = vshrl.u32 %v1184, 7
          %v1186 = vsub.s32 7, %v1185
          %v1187 = vrot.slane %v867, %v1186
          %v1188 = vmul.f32 %v1183, %v1187
          %v1189 = vadd.f32 %v1149, %v1188
          %v1190 = vand.u32 2147483647, %v1163
          %v1191 = vand.u32 2147483647, %v1172
          %v1192 = vadd.f32 %v1190, %v1191
          %v1193 = vmul.f32 %v1192, %v1187
          %v1194 = vadd.f32 %v1154, %v1193
          %1195 = vset.pattern.permute.xlu0 8
          %1196 = vperm.xlu0 %1195, %v859
          %v1197 = vpop.permute.xlu0 %1196
          %v1199 = vlaneseq
          %v1200 = vshrl.u32 %v1199, 7
          %v1201 = vsub.s32 0, %v1200
          %v1202 = vrot.slane %v862, %v1201
          %v1203 = vsub.f32 %v1197, %v1202
          %1204 = vset.pattern.permute.xlu0 8
          %1205 = vperm.xlu0 %1204, %v860
          %v1206 = vpop.permute.xlu0 %1205
          %v1208 = vlaneseq
          %v1209 = vshrl.u32 %v1208, 7
          %v1210 = vsub.s32 0, %v1209
          %v1211 = vrot.slane %v865, %v1210
          %v1212 = vsub.f32 %v1206, %v1211
          %v1213 = vmul.f32 %v1203, %v1203
          %v1214 = vmul.f32 %v1212, %v1212
          %v1215 = vadd.f32 %v1213, %v1214
          %v1216 = vlaneseq
          %v1217 = vshrl.u32 %v1216, 7
          %v1218 = vsub.s32 0, %v1217
          %v1219 = vrot.slane %v871, %v1218
          %v1220 = vmul.f32 %v1215, %v1219
          %v1221 = vsub.f32 0.0, %v1220
          %v1222 = vmul.f32 %v1221, 1.442695
          %v1223 = vpow.pop %v1222
          %v1224 = vlaneseq
          %v1225 = vshrl.u32 %v1224, 7
          %v1226 = vsub.s32 0, %v1225
          %v1227 = vrot.slane %v868, %v1226
          %v1228 = vmul.f32 %v1223, %v1227
          %v1229 = vadd.f32 %v1189, %v1228
          %v1230 = vand.u32 2147483647, %v1203
          %v1231 = vand.u32 2147483647, %v1212
          %v1232 = vadd.f32 %v1230, %v1231
          %v1233 = vmul.f32 %v1232, %v1227
          %v1234 = vadd.f32 %v1194, %v1233
          %1235 = vset.pattern.permute.xlu0 9
          %1236 = vperm.xlu0 %1235, %v859
          %v1237 = vpop.permute.xlu0 %1236
          %v1239 = vlaneseq
          %v1240 = vshrl.u32 %v1239, 7
          %v1241 = vsub.s32 1, %v1240
          %v1242 = vrot.slane %v862, %v1241
          %v1243 = vsub.f32 %v1237, %v1242
          %1244 = vset.pattern.permute.xlu0 9
          %1245 = vperm.xlu0 %1244, %v860
          %v1246 = vpop.permute.xlu0 %1245
          %v1248 = vlaneseq
          %v1249 = vshrl.u32 %v1248, 7
          %v1250 = vsub.s32 1, %v1249
          %v1251 = vrot.slane %v865, %v1250
          %v1252 = vsub.f32 %v1246, %v1251
          %v1253 = vmul.f32 %v1243, %v1243
          %v1254 = vmul.f32 %v1252, %v1252
          %v1255 = vadd.f32 %v1253, %v1254
          %v1256 = vlaneseq
          %v1257 = vshrl.u32 %v1256, 7
          %v1258 = vsub.s32 1, %v1257
          %v1259 = vrot.slane %v871, %v1258
          %v1260 = vmul.f32 %v1255, %v1259
          %v1261 = vsub.f32 0.0, %v1260
          %v1262 = vmul.f32 %v1261, 1.442695
          %v1263 = vpow.pop %v1262
          %v1264 = vlaneseq
          %v1265 = vshrl.u32 %v1264, 7
          %v1266 = vsub.s32 1, %v1265
          %v1267 = vrot.slane %v868, %v1266
          %v1268 = vmul.f32 %v1263, %v1267
          %v1269 = vadd.f32 %v1229, %v1268
          %v1270 = vand.u32 2147483647, %v1243
          %v1271 = vand.u32 2147483647, %v1252
          %v1272 = vadd.f32 %v1270, %v1271
          %v1273 = vmul.f32 %v1272, %v1267
          %v1274 = vadd.f32 %v1234, %v1273
          %1275 = vset.pattern.permute.xlu0 10
          %1276 = vperm.xlu0 %1275, %v859
          %v1277 = vpop.permute.xlu0 %1276
          %v1279 = vlaneseq
          %v1280 = vshrl.u32 %v1279, 7
          %v1281 = vsub.s32 2, %v1280
          %v1282 = vrot.slane %v862, %v1281
          %v1283 = vsub.f32 %v1277, %v1282
          %1284 = vset.pattern.permute.xlu0 10
          %1285 = vperm.xlu0 %1284, %v860
          %v1286 = vpop.permute.xlu0 %1285
          %v1288 = vlaneseq
          %v1289 = vshrl.u32 %v1288, 7
          %v1290 = vsub.s32 2, %v1289
          %v1291 = vrot.slane %v865, %v1290
          %v1292 = vsub.f32 %v1286, %v1291
          %v1293 = vmul.f32 %v1283, %v1283
          %v1294 = vmul.f32 %v1292, %v1292
          %v1295 = vadd.f32 %v1293, %v1294
          %v1296 = vlaneseq
          %v1297 = vshrl.u32 %v1296, 7
          %v1298 = vsub.s32 2, %v1297
          %v1299 = vrot.slane %v871, %v1298
          %v1300 = vmul.f32 %v1295, %v1299
          %v1301 = vsub.f32 0.0, %v1300
          %v1302 = vmul.f32 %v1301, 1.442695
          %v1303 = vpow.pop %v1302
          %v1304 = vlaneseq
          %v1305 = vshrl.u32 %v1304, 7
          %v1306 = vsub.s32 2, %v1305
          %v1307 = vrot.slane %v868, %v1306
          %v1308 = vmul.f32 %v1303, %v1307
          %v1309 = vadd.f32 %v1269, %v1308
          %v1310 = vand.u32 2147483647, %v1283
          %v1311 = vand.u32 2147483647, %v1292
          %v1312 = vadd.f32 %v1310, %v1311
          %v1313 = vmul.f32 %v1312, %v1307
          %v1314 = vadd.f32 %v1274, %v1313
          %1315 = vset.pattern.permute.xlu0 11
          %1316 = vperm.xlu0 %1315, %v859
          %v1317 = vpop.permute.xlu0 %1316
          %v1319 = vlaneseq
          %v1320 = vshrl.u32 %v1319, 7
          %v1321 = vsub.s32 3, %v1320
          %v1322 = vrot.slane %v862, %v1321
          %v1323 = vsub.f32 %v1317, %v1322
          %1324 = vset.pattern.permute.xlu0 11
          %1325 = vperm.xlu0 %1324, %v860
          %v1326 = vpop.permute.xlu0 %1325
          %v1328 = vlaneseq
          %v1329 = vshrl.u32 %v1328, 7
          %v1330 = vsub.s32 3, %v1329
          %v1331 = vrot.slane %v865, %v1330
          %v1332 = vsub.f32 %v1326, %v1331
          %v1333 = vmul.f32 %v1323, %v1323
          %v1334 = vmul.f32 %v1332, %v1332
          %v1335 = vadd.f32 %v1333, %v1334
          %v1336 = vlaneseq
          %v1337 = vshrl.u32 %v1336, 7
          %v1338 = vsub.s32 3, %v1337
          %v1339 = vrot.slane %v871, %v1338
          %v1340 = vmul.f32 %v1335, %v1339
          %v1341 = vsub.f32 0.0, %v1340
          %v1342 = vmul.f32 %v1341, 1.442695
          %v1343 = vpow.pop %v1342
          %v1344 = vlaneseq
          %v1345 = vshrl.u32 %v1344, 7
          %v1346 = vsub.s32 3, %v1345
          %v1347 = vrot.slane %v868, %v1346
          %v1348 = vmul.f32 %v1343, %v1347
          %v1349 = vadd.f32 %v1309, %v1348
          %v1350 = vand.u32 2147483647, %v1323
          %v1351 = vand.u32 2147483647, %v1332
          %v1352 = vadd.f32 %v1350, %v1351
          %v1353 = vmul.f32 %v1352, %v1347
          %v1354 = vadd.f32 %v1314, %v1353
          %1355 = vset.pattern.permute.xlu0 12
          %1356 = vperm.xlu0 %1355, %v859
          %v1357 = vpop.permute.xlu0 %1356
          %v1359 = vlaneseq
          %v1360 = vshrl.u32 %v1359, 7
          %v1361 = vsub.s32 4, %v1360
          %v1362 = vrot.slane %v862, %v1361
          %v1363 = vsub.f32 %v1357, %v1362
          %1364 = vset.pattern.permute.xlu0 12
          %1365 = vperm.xlu0 %1364, %v860
          %v1366 = vpop.permute.xlu0 %1365
          %v1368 = vlaneseq
          %v1369 = vshrl.u32 %v1368, 7
          %v1370 = vsub.s32 4, %v1369
          %v1371 = vrot.slane %v865, %v1370
          %v1372 = vsub.f32 %v1366, %v1371
          %v1373 = vmul.f32 %v1363, %v1363
          %v1374 = vmul.f32 %v1372, %v1372
          %v1375 = vadd.f32 %v1373, %v1374
          %v1376 = vlaneseq
          %v1377 = vshrl.u32 %v1376, 7
          %v1378 = vsub.s32 4, %v1377
          %v1379 = vrot.slane %v871, %v1378
          %v1380 = vmul.f32 %v1375, %v1379
          %v1381 = vsub.f32 0.0, %v1380
          %v1382 = vmul.f32 %v1381, 1.442695
          %v1383 = vpow.pop %v1382
          %v1384 = vlaneseq
          %v1385 = vshrl.u32 %v1384, 7
          %v1386 = vsub.s32 4, %v1385
          %v1387 = vrot.slane %v868, %v1386
          %v1388 = vmul.f32 %v1383, %v1387
          %v1389 = vadd.f32 %v1349, %v1388
          %v1390 = vand.u32 2147483647, %v1363
          %v1391 = vand.u32 2147483647, %v1372
          %v1392 = vadd.f32 %v1390, %v1391
          %v1393 = vmul.f32 %v1392, %v1387
          %v1394 = vadd.f32 %v1354, %v1393
          %1395 = vset.pattern.permute.xlu0 13
          %1396 = vperm.xlu0 %1395, %v859
          %v1397 = vpop.permute.xlu0 %1396
          %v1399 = vlaneseq
          %v1400 = vshrl.u32 %v1399, 7
          %v1401 = vsub.s32 5, %v1400
          %v1402 = vrot.slane %v862, %v1401
          %v1403 = vsub.f32 %v1397, %v1402
          %1404 = vset.pattern.permute.xlu0 13
          %1405 = vperm.xlu0 %1404, %v860
          %v1406 = vpop.permute.xlu0 %1405
          %v1408 = vlaneseq
          %v1409 = vshrl.u32 %v1408, 7
          %v1410 = vsub.s32 5, %v1409
          %v1411 = vrot.slane %v865, %v1410
          %v1412 = vsub.f32 %v1406, %v1411
          %v1413 = vmul.f32 %v1403, %v1403
          %v1414 = vmul.f32 %v1412, %v1412
          %v1415 = vadd.f32 %v1413, %v1414
          %v1416 = vlaneseq
          %v1417 = vshrl.u32 %v1416, 7
          %v1418 = vsub.s32 5, %v1417
          %v1419 = vrot.slane %v871, %v1418
          %v1420 = vmul.f32 %v1415, %v1419
          %v1421 = vsub.f32 0.0, %v1420
          %v1422 = vmul.f32 %v1421, 1.442695
          %v1423 = vpow.pop %v1422
          %v1424 = vlaneseq
          %v1425 = vshrl.u32 %v1424, 7
          %v1426 = vsub.s32 5, %v1425
          %v1427 = vrot.slane %v868, %v1426
          %v1428 = vmul.f32 %v1423, %v1427
          %v1429 = vadd.f32 %v1389, %v1428
          %v1430 = vand.u32 2147483647, %v1403
          %v1431 = vand.u32 2147483647, %v1412
          %v1432 = vadd.f32 %v1430, %v1431
          %v1433 = vmul.f32 %v1432, %v1427
          %v1434 = vadd.f32 %v1394, %v1433
          %1435 = vset.pattern.permute.xlu0 14
          %1436 = vperm.xlu0 %1435, %v859
          %v1437 = vpop.permute.xlu0 %1436
          %v1439 = vlaneseq
          %v1440 = vshrl.u32 %v1439, 7
          %v1441 = vsub.s32 6, %v1440
          %v1442 = vrot.slane %v862, %v1441
          %v1443 = vsub.f32 %v1437, %v1442
          %1444 = vset.pattern.permute.xlu0 14
          %1445 = vperm.xlu0 %1444, %v860
          %v1446 = vpop.permute.xlu0 %1445
          %v1448 = vlaneseq
          %v1449 = vshrl.u32 %v1448, 7
          %v1450 = vsub.s32 6, %v1449
          %v1451 = vrot.slane %v865, %v1450
          %v1452 = vsub.f32 %v1446, %v1451
          %v1453 = vmul.f32 %v1443, %v1443
          %v1454 = vmul.f32 %v1452, %v1452
          %v1455 = vadd.f32 %v1453, %v1454
          %v1456 = vlaneseq
          %v1457 = vshrl.u32 %v1456, 7
          %v1458 = vsub.s32 6, %v1457
          %v1459 = vrot.slane %v871, %v1458
          %v1460 = vmul.f32 %v1455, %v1459
          %v1461 = vsub.f32 0.0, %v1460
          %v1462 = vmul.f32 %v1461, 1.442695
          %v1463 = vpow.pop %v1462
          %v1464 = vlaneseq
          %v1465 = vshrl.u32 %v1464, 7
          %v1466 = vsub.s32 6, %v1465
          %v1467 = vrot.slane %v868, %v1466
          %v1468 = vmul.f32 %v1463, %v1467
          %v1469 = vadd.f32 %v1429, %v1468
          %v1470 = vand.u32 2147483647, %v1443
          %v1471 = vand.u32 2147483647, %v1452
          %v1472 = vadd.f32 %v1470, %v1471
          %v1473 = vmul.f32 %v1472, %v1467
          %v1474 = vadd.f32 %v1434, %v1473
          %1475 = vset.pattern.permute.xlu0 15
          %1476 = vperm.xlu0 %1475, %v859
          %v1477 = vpop.permute.xlu0 %1476
          %v1479 = vlaneseq
          %v1480 = vshrl.u32 %v1479, 7
          %v1481 = vsub.s32 7, %v1480
          %v1482 = vrot.slane %v862, %v1481
          %v1483 = vsub.f32 %v1477, %v1482
          %1484 = vset.pattern.permute.xlu0 15
          %1485 = vperm.xlu0 %1484, %v860
          %v1486 = vpop.permute.xlu0 %1485
          %v1488 = vlaneseq
          %v1489 = vshrl.u32 %v1488, 7
          %v1490 = vsub.s32 7, %v1489
          %v1491 = vrot.slane %v865, %v1490
          %v1492 = vsub.f32 %v1486, %v1491
          %v1493 = vmul.f32 %v1483, %v1483
          %v1494 = vmul.f32 %v1492, %v1492
          %v1495 = vadd.f32 %v1493, %v1494
          %v1496 = vlaneseq
          %v1497 = vshrl.u32 %v1496, 7
          %v1498 = vsub.s32 7, %v1497
          %v1499 = vrot.slane %v871, %v1498
          %v1500 = vmul.f32 %v1495, %v1499
          %v1501 = vsub.f32 0.0, %v1500
          %v1502 = vmul.f32 %v1501, 1.442695
          %v1503 = vpow.pop %v1502
          %v1504 = vlaneseq
          %v1505 = vshrl.u32 %v1504, 7
          %v1506 = vsub.s32 7, %v1505
          %v1507 = vrot.slane %v868, %v1506
          %v1508 = vmul.f32 %v1503, %v1507
          %v1509 = vadd.f32 %v1469, %v1508
          %v1510 = vand.u32 2147483647, %v1483
          %v1511 = vand.u32 2147483647, %v1492
          %v1512 = vadd.f32 %v1510, %v1511
          %v1513 = vmul.f32 %v1512, %v1507
          %v1514 = vadd.f32 %v1474, %v1513
          %1515 = vset.pattern.permute.xlu0 16
          %1516 = vperm.xlu0 %1515, %v859
          %v1517 = vpop.permute.xlu0 %1516
          %v1519 = vlaneseq
          %v1520 = vshrl.u32 %v1519, 7
          %v1521 = vsub.s32 0, %v1520
          %v1522 = vrot.slane %v863, %v1521
          %v1523 = vsub.f32 %v1517, %v1522
          %1524 = vset.pattern.permute.xlu0 16
          %1525 = vperm.xlu0 %1524, %v860
          %v1526 = vpop.permute.xlu0 %1525
          %v1528 = vlaneseq
          %v1529 = vshrl.u32 %v1528, 7
          %v1530 = vsub.s32 0, %v1529
          %v1531 = vrot.slane %v866, %v1530
          %v1532 = vsub.f32 %v1526, %v1531
          %v1533 = vmul.f32 %v1523, %v1523
          %v1534 = vmul.f32 %v1532, %v1532
          %v1535 = vadd.f32 %v1533, %v1534
          %v1536 = vlaneseq
          %v1537 = vshrl.u32 %v1536, 7
          %v1538 = vsub.s32 0, %v1537
          %v1539 = vrot.slane %v872, %v1538
          %v1540 = vmul.f32 %v1535, %v1539
          %v1541 = vsub.f32 0.0, %v1540
          %v1542 = vmul.f32 %v1541, 1.442695
          %v1543 = vpow.pop %v1542
          %v1544 = vlaneseq
          %v1545 = vshrl.u32 %v1544, 7
          %v1546 = vsub.s32 0, %v1545
          %v1547 = vrot.slane %v869, %v1546
          %v1548 = vmul.f32 %v1543, %v1547
          %v1549 = vadd.f32 %v1509, %v1548
          %v1550 = vand.u32 2147483647, %v1523
          %v1551 = vand.u32 2147483647, %v1532
          %v1552 = vadd.f32 %v1550, %v1551
          %v1553 = vmul.f32 %v1552, %v1547
          %v1554 = vadd.f32 %v1514, %v1553
          %v1555 = vld [vmem:[%s11] sm:$0x1]
          %v1557 = vlaneseq
          %v1558 = vshrl.u32 %v1557, 7
          %v1559 = vsub.s32 0, %v1558
          %v1560 = vrot.slane %v1555, %v1559
          %v1562 = vmul.f32 %v1549, %v1560
          %v1563 = vmax.f32 %v1562, 1e-06
          %v1564 = vsub.f32 1.0, %v1563
          %v1565 = vld [vmem:[%s546] sm:$0xff]
          %v1566 = vmul.f32 %v1564, 0.01
          %v1567 = vadd.f32 %v1554, %v1566
          %v1568 = vadd.f32 %v1565, %v1567
          %1569 = vst [vmem:[%s546] sm:$0xff] %v1568
          %v1570 = vsel %vm575, %v1554, 0.0
          %v1571 = vrot.slane %v1570, 4
          %v1572 = vadd.f32 %v1570, %v1571
          %v1573 = vrot.slane %v1572, 2
          %v1574 = vadd.f32 %v1572, %v1573
          %v1575 = vrot.slane %v1574, 1
          %v1576 = vadd.f32 %v1574, %v1575
          %1577 = vst [vmem:[%s553 + $0x3] sm:$0x1] %v1576
        $region96: #{tpu_custom_call.1} parent=63 // pred_fallthru
          _
        %s1578 = sand.u32 %s294, 1
        %s1579 = scalar_lea.sflag [#allocation6], %s1578
        %s1580 = sand.u32 %s294, 1
        %s1581 = smul.addr %s1580, 8
        %s1582 = scalar_lea.vmem [#allocation14], %s1581
        %s1583 = sand.u32 %s320, 1
        %s1584 = scalar_lea.sflag [#allocation16], %s1583
        %s1585 = sand.u32 %s320, 1
        %s1586 = smul.addr %s1585, 4
        %s1587 = scalar_lea.vmem [#allocation15], %s1586
        // Predicated region
        $region97: #{tpu_custom_call.1} parent=63 // pred_check
          %p1588 = pneg %p304
        $region98: #{tpu_custom_call.1} parent=63 // pred_check_branch
          %1590 = sbr.rel (%p1588) target = $region100
        $region99: #{tpu_custom_call.1} parent=63 // pred_region
          %s1592 = ssub.s32 128, 128
          %1593 = vsyncadd %s1579, %s1592
          %s1594 = smul.addr %s35, 128
          %s1595 = scalar_lea.hbm %s12, %s1594
          %s1597 = sshll.u32 %s1582, 4
          %s1598 = int_to_ptr.vmem [resolvable:$true] %s1597
          %1600 = dma.vmem_to_hbm [thread:$0]  %s1598, 128, %s1595, %s1579
        $region100: #{tpu_custom_call.1} parent=63 // pred_fallthru
          _
        // Predicated region
        $region101: #{tpu_custom_call.1} parent=63 // pred_check
          %p1601 = pneg %p330
        $region102: #{tpu_custom_call.1} parent=63 // pred_check_branch
          %1603 = sbr.rel (%p1601) target = $region104
        $region103: #{tpu_custom_call.1} parent=63 // pred_region
          %s1605 = ssub.s32 64, 64
          %1606 = vsyncadd %s1584, %s1605
          %s1607 = smul.addr %s35, 64
          %s1608 = scalar_lea.hbm %s13, %s1607
          %s1610 = sshll.u32 %s1587, 4
          %s1611 = int_to_ptr.vmem [resolvable:$true] %s1610
          %1613 = dma.vmem_to_hbm [thread:$0]  %s1611, 64, %s1608, %s1584
        $region104: #{tpu_custom_call.1} parent=63 // pred_fallthru
          _
      $region64: #{tpu_custom_call.1} parent=5 // pred_fallthru
        _
      %p1614 = scmp.le.s32.totalorder 2, %s30
      // Predicated region
      $region105: #{tpu_custom_call.1} parent=5 // pred_check
        %p1615 = pneg %p1614
      $region106: #{tpu_custom_call.1} parent=5 // pred_check_branch
        %1617 = sbr.rel (%p1615) target = $region108
      $region107: #{tpu_custom_call.1} parent=5 // pred_region
        %s1618 = ssub.s32 %s30, 2
        // Predicated region
        $region109: #{tpu_custom_call.1} parent=107 // pred_check
          %p1619 = pneg %p310
        $region110: #{tpu_custom_call.1} parent=107 // pred_check_branch
          %1621 = sbr.rel (%p1619) target = $region112
        $region111: #{tpu_custom_call.1} parent=107 // pred_region
          %s1622 = sand.u32 %s295, 1
          %s1623 = scalar_lea.sflag [#allocation6], %s1622
          %s1624 = sand.u32 %s295, 1
          %s1625 = smul.addr %s1624, 8
          %s1626 = scalar_lea.vmem [#allocation14], %s1625
          %1627 = dma.done %s1623, 128
        $region112: #{tpu_custom_call.1} parent=107 // pred_fallthru
          _
        // Predicated region
        $region113: #{tpu_custom_call.1} parent=107 // pred_check
          %p1628 = pneg %p336
        $region114: #{tpu_custom_call.1} parent=107 // pred_check_branch
          %1630 = sbr.rel (%p1628) target = $region116
        $region115: #{tpu_custom_call.1} parent=107 // pred_region
          %s1631 = sand.u32 %s321, 1
          %s1632 = scalar_lea.sflag [#allocation16], %s1631
          %s1633 = sand.u32 %s321, 1
          %s1634 = smul.addr %s1633, 4
          %s1635 = scalar_lea.vmem [#allocation15], %s1634
          %1636 = dma.done %s1632, 64
        $region116: #{tpu_custom_call.1} parent=107 // pred_fallthru
          _
      $region108: #{tpu_custom_call.1} parent=5 // pred_fallthru
        _
    $region6: #{tpu_custom_call.1} parent=1 // loop_footer
      %s34 = sadd.s32 1, %s30
    $region7: #{tpu_custom_call.1} parent=1 // loop_footer_branch
      %29 = sbr.rel target = $region3
    $region8: #{tpu_custom_call.1} parent=1 // loop_exit
      _
    %1637 = vsyncpa [#allocation5], 1
    %s1638 = scalar_lea.sflag [#allocation5], 1
    %1639 = vsyncpa %s1638, 1
    %1640 = vsyncpa [#allocation8], 1
    %1641 = vsyncpa [#allocation13], 1
    %1642 = vsyncpa [#allocation6], 1
    %s1643 = scalar_lea.sflag [#allocation6], 1
    %1644 = vsyncpa %s1643, 1
    %1645 = vsyncpa [#allocation16], 1
    %s1646 = scalar_lea.sflag [#allocation16], 1
    %1647 = vsyncpa %s1646, 1

</llo_original>
